<compile_context>
chip_gen: v7x
topology: tpu7x:2x2x1
jax: 0.10.0
libtpu: 0.0.40
codegen_flags: <defaults>
</compile_context>

<pallas_src>
import jax
import jax.numpy as jnp
from jax.experimental import pallas as pl
from jax.experimental.pallas import tpu as pltpu

S = 7
B = 2
C = 20
NUM_CH = C + 5 * B            # 30
LAMBDA_COORD = 5.0
LAMBDA_NOOBJ = 0.5


# ----------------------------------------------------------------------------
# Pallas kernel: one (TM, 30) tile of cells per grid step, scalar accumulator
# ----------------------------------------------------------------------------
def yolo_loss_kernel(p_ref, t_ref, out_ref):
    step = pl.program_id(0)
    f32 = jnp.float32

    # ---- responsible-box selection via IoU (midpoint format) ----------------
    pb1 = p_ref[:, 21:25].astype(f32)          # (TM, 4)  box 1: x, y, w, h
    pb2 = p_ref[:, 26:30].astype(f32)          # (TM, 4)  box 2
    tb = t_ref[:, 21:25].astype(f32)           # (TM, 4)  target box

    t_lo = tb[:, 0:2] - 0.5 * tb[:, 2:4]
    t_hi = tb[:, 0:2] + 0.5 * tb[:, 2:4]
    area_t = jnp.abs((t_hi[:, 0:1] - t_lo[:, 0:1]) * (t_hi[:, 1:2] - t_lo[:, 1:2]))

    def _iou(b):
        b_lo = b[:, 0:2] - 0.5 * b[:, 2:4]
        b_hi = b[:, 0:2] + 0.5 * b[:, 2:4]
        wh = jnp.maximum(jnp.minimum(b_hi, t_hi) - jnp.maximum(b_lo, t_lo), 0.0)
        inter = wh[:, 0:1] * wh[:, 1:2]
        area_b = jnp.abs((b_hi[:, 0:1] - b_lo[:, 0:1]) * (b_hi[:, 1:2] - b_lo[:, 1:2]))
        # approx reciprocal: only the argmax of the two IoUs is used downstream
        return inter * pl.reciprocal(area_b + area_t - inter + 1e-6, approx=True)

    iou1 = _iou(pb1)                           # (TM, 1)
    iou2 = _iou(pb2)                           # (TM, 1)
    # torch.max returns the first maximal index -> box 2 only on strict improvement
    chosen = (iou2 > iou1).astype(f32)         # (TM, 1)
    not_chosen = 1.0 - chosen

    iobj = t_ref[:, 20:21].astype(f32)         # (TM, 1) objectness / target conf
    noobj = 1.0 - iobj

    # ---- coordinate term -----------------------------------------------------
    box_p = iobj * (chosen * pb2 + not_chosen * pb1)       # (TM, 4)
    box_t = iobj * tb                                      # (TM, 4)
    d_xy = box_p[:, 0:2] - box_t[:, 0:2]                   # (TM, 2)
    # matches the module exactly (sqrt of iobj-masked w/h; 0 for no-object cells)
    d_wh = jnp.sqrt(box_p[:, 2:4]) - jnp.sqrt(box_t[:, 2:4])
    coord_sq = d_xy * d_xy + d_wh * d_wh                   # (TM, 2)

    # ---- confidence terms ------------------------------------------------------
    p_c1 = p_ref[:, 20:21].astype(f32)
    p_c2 = p_ref[:, 25:26].astype(f32)
    pred_conf = chosen * p_c2 + not_chosen * p_c1
    e_obj = iobj * pred_conf - iobj * iobj                 # target conf channel == iobj
    e_no1 = noobj * (p_c1 - iobj)
    e_no2 = noobj * (p_c2 - iobj)

    # ---- class term ------------------------------------------------------------
    e_cls = iobj * (p_ref[:, 0:20].astype(f32) - t_ref[:, 0:20].astype(f32))  # (TM, 20)

    # ---- fused reduction: one per-cell partial, one lane reduce, one full reduce
    per_cell = (LAMBDA_COORD * (coord_sq[:, 0:1] + coord_sq[:, 1:2])
                + e_obj * e_obj
                + LAMBDA_NOOBJ * (e_no1 * e_no1 + e_no2 * e_no2)
                + jnp.sum(e_cls * e_cls, axis=1, keepdims=True))               # (TM, 1)
    partial = jnp.sum(per_cell)

    @pl.when(step == 0)
    def _init():
        out_ref[0, 0] = 0.0

    out_ref[0, 0] += partial


# ----------------------------------------------------------------------------
# Wrapper: natural (M, 30) layout, zero-pad cells, grid over cell tiles
# ----------------------------------------------------------------------------
def yolo_loss_pallas(predictions, target, *, max_block_cells=512):
    """predictions, target: (N, S, S, C + B*5) -> scalar loss (float32)."""
    n, s1, s2, ch = predictions.shape
    assert (s1, s2, ch) == (S, S, NUM_CH), (s1, s2, ch)
    m = n * s1 * s2

    p = predictions.reshape(m, ch)     # free reshape, no transpose
    t = target.reshape(m, ch)

    # Pad cells to a multiple of 128 sublanes; zero rows add exactly 0 loss
    # (iobj = 0, all predictions/targets = 0 in the padding).
    m_pad = ((m + 127) // 128) * 128
    if m_pad != m:
        pad = ((0, m_pad - m), (0, 0))
        p = jnp.pad(p, pad)
        t = jnp.pad(t, pad)

    # Largest tile (multiple of 128 rows) dividing m_pad, capped to keep
    # vreg/VMEM pressure modest while amortizing per-step overhead.
    blocks = m_pad // 128
    k = 1
    for cand in range(min(blocks, max(1, max_block_cells // 128)), 0, -1):
        if blocks % cand == 0:
            k = cand
            break
    tm = 128 * k
    grid = (m_pad // tm,)

    out = pl.pallas_call(
        yolo_loss_kernel,
        out_shape=jax.ShapeDtypeStruct((1, 1), jnp.float32),
        grid=grid,
        in_specs=[
            pl.BlockSpec((tm, ch), lambda i: (i, 0)),
            pl.BlockSpec((tm, ch), lambda i: (i, 0)),
        ],
        out_specs=pl.BlockSpec((1, 1), lambda i: (0, 0),
                               memory_space=pltpu.MemorySpace.SMEM),
        compiler_params=pltpu.CompilerParams(
            dimension_semantics=("arbitrary",),
        ),
    )(p, t)
    return out[0, 0]


# ----------------------------------------------------------------------------
# Pure-JAX reference (mirrors the PyTorch forward exactly) for validation
# ----------------------------------------------------------------------------
def _iou_ref(b1, b2):
    b1_x1 = b1[..., 0:1] - b1[..., 2:3] / 2.0
    b1_y1 = b1[..., 1:2] - b1[..., 3:4] / 2.0
    b1_x2 = b1[..., 0:1] + b1[..., 2:3] / 2.0
    b1_y2 = b1[..., 1:2] + b1[..., 3:4] / 2.0
    b2_x1 = b2[..., 0:1] - b2[..., 2:3] / 2.0
    b2_y1 = b2[..., 1:2] - b2[..., 3:4] / 2.0
    b2_x2 = b2[..., 0:1] + b2[..., 2:3] / 2.0
    b2_y2 = b2[..., 1:2] + b2[..., 3:4] / 2.0
    x1 = jnp.maximum(b1_x1, b2_x1)
    y1 = jnp.maximum(b1_y1, b2_y1)
    x2 = jnp.minimum(b1_x2, b2_x2)
    y2 = jnp.minimum(b1_y2, b2_y2)
    inter = jnp.maximum(x2 - x1, 0.0) * jnp.maximum(y2 - y1, 0.0)
    a1 = jnp.abs((b1_x2 - b1_x1) * (b1_y2 - b1_y1))
    a2 = jnp.abs((b2_x2 - b2_x1) * (b2_y2 - b2_y1))
    return inter / (a1 + a2 - inter + 1e-6)


def yolo_loss_ref(pred, targ):
    iou1 = _iou_ref(pred[..., 21:25], targ[..., 21:25])
    iou2 = _iou_ref(pred[..., 26:30], targ[..., 21:25])
    chosen = (iou2 > iou1).astype(pred.dtype)
    iobj = targ[..., 20:21]
    box_pred = iobj * (chosen * pred[..., 26:30] + (1 - chosen) * pred[..., 21:25])
    box_targ = iobj * targ[..., 21:25]
    box_pred = box_pred.at[..., 2:4].set(jnp.sqrt(box_pred[..., 2:4]))
    box_targ = box_targ.at[..., 2:4].set(jnp.sqrt(box_targ[..., 2:4]))
    coord = LAMBDA_COORD * jnp.sum((box_pred - box_targ) ** 2)
    pred_box = chosen * pred[..., 25:26] + (1 - chosen) * pred[..., 20:21]
    obj = jnp.sum((iobj * pred_box - iobj * targ[..., 20:21]) ** 2)
    noobj = jnp.sum(((1 - iobj) * pred[..., 20:21] - (1 - iobj) * targ[..., 20:21]) ** 2)
    noobj += jnp.sum(((1 - iobj) * pred[..., 25:26] - (1 - iobj) * targ[..., 20:21]) ** 2)
    noobj = LAMBDA_NOOBJ * noobj
    cls = jnp.sum((iobj * pred[..., :20] - iobj * targ[..., :20]) ** 2)
    return coord + obj + noobj + cls


# ----------------------------------------------------------------------------
if __name__ == "__main__":
    key = jax.random.PRNGKey(0)
    k1, k2, k3 = jax.random.split(key, 3)

    N = 2
    # positive values so sqrt(w/h) is well defined (as the module assumes)
    predictions = jax.random.uniform(k1, (N, S, S, NUM_CH), jnp.float32,
                                     minval=0.05, maxval=1.0)
    target = jax.random.uniform(k2, (N, S, S, NUM_CH), jnp.float32,
                                minval=0.05, maxval=1.0)
    # objectness indicator in target[..., 20] is a 0/1 mask in real data
    iobj_mask = (jax.random.uniform(k3, (N, S, S)) > 0.5).astype(jnp.float32)
    target = target.at[..., 20].set(iobj_mask)

    loss = yolo_loss_pallas(predictions, target)
    jax.block_until_ready(loss)

    ref = yolo_loss_ref(predictions, target)
    assert jnp.allclose(loss, ref, rtol=1e-4, atol=1e-3), (loss, ref)

    print("KERNEL_OK")
</pallas_src>

<mosaic_0001>
module attributes {stable_mosaic.version = 11 : i64} {
  func.func @yolo_loss_kernel(%arg0: i32, %arg1: memref<128x30xf32, #tpu.memory_space<vmem>>, %arg2: memref<128x30xf32, #tpu.memory_space<vmem>>, %arg3: memref<1x1xf32, #tpu.memory_space<smem>>) attributes {dimension_semantics = [#tpu.dimension_semantics<arbitrary>], iteration_bounds = array<i64: 1>, scalar_prefetch = 0 : i64, scratch_operands = 0 : i64, tpu.core_type = #tpu.core_type<tc>, window_params = [{transform_indices = @transform_0, window_bounds = array<i64: 128, 30>}, {transform_indices = @transform_1, window_bounds = array<i64: 128, 30>}, {transform_indices = @transform_2, window_bounds = array<i64: 1, 1>}]} {
    %c0 = arith.constant 0 : index
    %c21 = arith.constant 21 : index
    %0 = vector.load %arg1[%c0, %c21] : memref<128x30xf32, #tpu.memory_space<vmem>>, vector<128x4xf32>
    %c0_0 = arith.constant 0 : index
    %c26 = arith.constant 26 : index
    %1 = vector.load %arg1[%c0_0, %c26] : memref<128x30xf32, #tpu.memory_space<vmem>>, vector<128x4xf32>
    %c0_1 = arith.constant 0 : index
    %c21_2 = arith.constant 21 : index
    %2 = vector.load %arg2[%c0_1, %c21_2] : memref<128x30xf32, #tpu.memory_space<vmem>>, vector<128x4xf32>
    %3 = vector.extract_strided_slice %2 {offsets = [0, 0], sizes = [128, 2], strides = [1, 1]} : vector<128x4xf32> to vector<128x2xf32>
    %4 = vector.extract_strided_slice %2 {offsets = [0, 2], sizes = [128, 2], strides = [1, 1]} : vector<128x4xf32> to vector<128x2xf32>
    %cst = arith.constant 5.000000e-01 : f32
    %5 = vector.broadcast %cst : f32 to vector<128x2xf32>
    %6 = arith.mulf %5, %4 : vector<128x2xf32>
    %7 = arith.subf %3, %6 : vector<128x2xf32>
    %8 = vector.extract_strided_slice %2 {offsets = [0, 0], sizes = [128, 2], strides = [1, 1]} : vector<128x4xf32> to vector<128x2xf32>
    %9 = vector.extract_strided_slice %2 {offsets = [0, 2], sizes = [128, 2], strides = [1, 1]} : vector<128x4xf32> to vector<128x2xf32>
    %cst_3 = arith.constant 5.000000e-01 : f32
    %10 = vector.broadcast %cst_3 : f32 to vector<128x2xf32>
    %11 = arith.mulf %10, %9 : vector<128x2xf32>
    %12 = arith.addf %8, %11 : vector<128x2xf32>
    %13 = vector.extract_strided_slice %12 {offsets = [0, 0], sizes = [128, 1], strides = [1, 1]} : vector<128x2xf32> to vector<128x1xf32>
    %14 = vector.extract_strided_slice %7 {offsets = [0, 0], sizes = [128, 1], strides = [1, 1]} : vector<128x2xf32> to vector<128x1xf32>
    %15 = arith.subf %13, %14 : vector<128x1xf32>
    %16 = vector.extract_strided_slice %12 {offsets = [0, 1], sizes = [128, 1], strides = [1, 1]} : vector<128x2xf32> to vector<128x1xf32>
    %17 = vector.extract_strided_slice %7 {offsets = [0, 1], sizes = [128, 1], strides = [1, 1]} : vector<128x2xf32> to vector<128x1xf32>
    %18 = arith.subf %16, %17 : vector<128x1xf32>
    %19 = arith.mulf %15, %18 : vector<128x1xf32>
    %20 = math.absf %19 : vector<128x1xf32>
    %21 = vector.extract_strided_slice %0 {offsets = [0, 0], sizes = [128, 2], strides = [1, 1]} : vector<128x4xf32> to vector<128x2xf32>
    %22 = vector.extract_strided_slice %0 {offsets = [0, 2], sizes = [128, 2], strides = [1, 1]} : vector<128x4xf32> to vector<128x2xf32>
    %cst_4 = arith.constant 5.000000e-01 : f32
    %23 = vector.broadcast %cst_4 : f32 to vector<128x2xf32>
    %24 = arith.mulf %23, %22 : vector<128x2xf32>
    %25 = arith.subf %21, %24 : vector<128x2xf32>
    %26 = vector.extract_strided_slice %0 {offsets = [0, 0], sizes = [128, 2], strides = [1, 1]} : vector<128x4xf32> to vector<128x2xf32>
    %27 = vector.extract_strided_slice %0 {offsets = [0, 2], sizes = [128, 2], strides = [1, 1]} : vector<128x4xf32> to vector<128x2xf32>
    %cst_5 = arith.constant 5.000000e-01 : f32
    %28 = vector.broadcast %cst_5 : f32 to vector<128x2xf32>
    %29 = arith.mulf %28, %27 : vector<128x2xf32>
    %30 = arith.addf %26, %29 : vector<128x2xf32>
    %31 = arith.minimumf %30, %12 : vector<128x2xf32>
    %32 = arith.maximumf %25, %7 : vector<128x2xf32>
    %33 = arith.subf %31, %32 : vector<128x2xf32>
    %cst_6 = arith.constant 0.000000e+00 : f32
    %34 = vector.broadcast %cst_6 : f32 to vector<128x2xf32>
    %35 = arith.maximumf %33, %34 : vector<128x2xf32>
    %36 = vector.extract_strided_slice %35 {offsets = [0, 0], sizes = [128, 1], strides = [1, 1]} : vector<128x2xf32> to vector<128x1xf32>
    %37 = vector.extract_strided_slice %35 {offsets = [0, 1], sizes = [128, 1], strides = [1, 1]} : vector<128x2xf32> to vector<128x1xf32>
    %38 = arith.mulf %36, %37 : vector<128x1xf32>
    %39 = vector.extract_strided_slice %30 {offsets = [0, 0], sizes = [128, 1], strides = [1, 1]} : vector<128x2xf32> to vector<128x1xf32>
    %40 = vector.extract_strided_slice %25 {offsets = [0, 0], sizes = [128, 1], strides = [1, 1]} : vector<128x2xf32> to vector<128x1xf32>
    %41 = arith.subf %39, %40 : vector<128x1xf32>
    %42 = vector.extract_strided_slice %30 {offsets = [0, 1], sizes = [128, 1], strides = [1, 1]} : vector<128x2xf32> to vector<128x1xf32>
    %43 = vector.extract_strided_slice %25 {offsets = [0, 1], sizes = [128, 1], strides = [1, 1]} : vector<128x2xf32> to vector<128x1xf32>
    %44 = arith.subf %42, %43 : vector<128x1xf32>
    %45 = arith.mulf %41, %44 : vector<128x1xf32>
    %46 = math.absf %45 : vector<128x1xf32>
    %47 = arith.addf %46, %20 : vector<128x1xf32>
    %48 = arith.subf %47, %38 : vector<128x1xf32>
    %cst_7 = arith.constant 9.99999997E-7 : f32
    %49 = vector.broadcast %cst_7 : f32 to vector<128x1xf32>
    %50 = arith.addf %48, %49 : vector<128x1xf32>
    %51 = tpu.reciprocal %50 {approx = true} : vector<128x1xf32> -> vector<128x1xf32>
    %52 = arith.mulf %38, %51 : vector<128x1xf32>
    %53 = vector.extract_strided_slice %1 {offsets = [0, 0], sizes = [128, 2], strides = [1, 1]} : vector<128x4xf32> to vector<128x2xf32>
    %54 = vector.extract_strided_slice %1 {offsets = [0, 2], sizes = [128, 2], strides = [1, 1]} : vector<128x4xf32> to vector<128x2xf32>
    %cst_8 = arith.constant 5.000000e-01 : f32
    %55 = vector.broadcast %cst_8 : f32 to vector<128x2xf32>
    %56 = arith.mulf %55, %54 : vector<128x2xf32>
    %57 = arith.subf %53, %56 : vector<128x2xf32>
    %58 = vector.extract_strided_slice %1 {offsets = [0, 0], sizes = [128, 2], strides = [1, 1]} : vector<128x4xf32> to vector<128x2xf32>
    %59 = vector.extract_strided_slice %1 {offsets = [0, 2], sizes = [128, 2], strides = [1, 1]} : vector<128x4xf32> to vector<128x2xf32>
    %cst_9 = arith.constant 5.000000e-01 : f32
    %60 = vector.broadcast %cst_9 : f32 to vector<128x2xf32>
    %61 = arith.mulf %60, %59 : vector<128x2xf32>
    %62 = arith.addf %58, %61 : vector<128x2xf32>
    %63 = arith.minimumf %62, %12 : vector<128x2xf32>
    %64 = arith.maximumf %57, %7 : vector<128x2xf32>
    %65 = arith.subf %63, %64 : vector<128x2xf32>
    %cst_10 = arith.constant 0.000000e+00 : f32
    %66 = vector.broadcast %cst_10 : f32 to vector<128x2xf32>
    %67 = arith.maximumf %65, %66 : vector<128x2xf32>
    %68 = vector.extract_strided_slice %67 {offsets = [0, 0], sizes = [128, 1], strides = [1, 1]} : vector<128x2xf32> to vector<128x1xf32>
    %69 = vector.extract_strided_slice %67 {offsets = [0, 1], sizes = [128, 1], strides = [1, 1]} : vector<128x2xf32> to vector<128x1xf32>
    %70 = arith.mulf %68, %69 : vector<128x1xf32>
    %71 = vector.extract_strided_slice %62 {offsets = [0, 0], sizes = [128, 1], strides = [1, 1]} : vector<128x2xf32> to vector<128x1xf32>
    %72 = vector.extract_strided_slice %57 {offsets = [0, 0], sizes = [128, 1], strides = [1, 1]} : vector<128x2xf32> to vector<128x1xf32>
    %73 = arith.subf %71, %72 : vector<128x1xf32>
    %74 = vector.extract_strided_slice %62 {offsets = [0, 1], sizes = [128, 1], strides = [1, 1]} : vector<128x2xf32> to vector<128x1xf32>
    %75 = vector.extract_strided_slice %57 {offsets = [0, 1], sizes = [128, 1], strides = [1, 1]} : vector<128x2xf32> to vector<128x1xf32>
    %76 = arith.subf %74, %75 : vector<128x1xf32>
    %77 = arith.mulf %73, %76 : vector<128x1xf32>
    %78 = math.absf %77 : vector<128x1xf32>
    %79 = arith.addf %78, %20 : vector<128x1xf32>
    %80 = arith.subf %79, %70 : vector<128x1xf32>
    %cst_11 = arith.constant 9.99999997E-7 : f32
    %81 = vector.broadcast %cst_11 : f32 to vector<128x1xf32>
    %82 = arith.addf %80, %81 : vector<128x1xf32>
    %83 = tpu.reciprocal %82 {approx = true} : vector<128x1xf32> -> vector<128x1xf32>
    %84 = arith.mulf %70, %83 : vector<128x1xf32>
    %85 = arith.cmpf ogt, %84, %52 : vector<128x1xf32>
    %86 = arith.extui %85 : vector<128x1xi1> to vector<128x1xi32>
    %87 = arith.sitofp %86 : vector<128x1xi32> to vector<128x1xf32>
    %cst_12 = arith.constant 1.000000e+00 : f32
    %88 = vector.broadcast %cst_12 : f32 to vector<128x1xf32>
    %89 = arith.subf %88, %87 : vector<128x1xf32>
    %c0_13 = arith.constant 0 : index
    %c20 = arith.constant 20 : index
    %90 = vector.load %arg2[%c0_13, %c20] : memref<128x30xf32, #tpu.memory_space<vmem>>, vector<128x1xf32>
    %cst_14 = arith.constant 1.000000e+00 : f32
    %91 = vector.broadcast %cst_14 : f32 to vector<128x1xf32>
    %92 = arith.subf %91, %90 : vector<128x1xf32>
    %93 = vector.broadcast %87 : vector<128x1xf32> to vector<128x4xf32>
    %94 = arith.mulf %93, %1 : vector<128x4xf32>
    %95 = vector.broadcast %89 : vector<128x1xf32> to vector<128x4xf32>
    %96 = arith.mulf %95, %0 : vector<128x4xf32>
    %97 = arith.addf %94, %96 : vector<128x4xf32>
    %98 = vector.broadcast %90 : vector<128x1xf32> to vector<128x4xf32>
    %99 = arith.mulf %98, %97 : vector<128x4xf32>
    %100 = vector.broadcast %90 : vector<128x1xf32> to vector<128x4xf32>
    %101 = arith.mulf %100, %2 : vector<128x4xf32>
    %102 = vector.extract_strided_slice %99 {offsets = [0, 0], sizes = [128, 2], strides = [1, 1]} : vector<128x4xf32> to vector<128x2xf32>
    %103 = vector.extract_strided_slice %101 {offsets = [0, 0], sizes = [128, 2], strides = [1, 1]} : vector<128x4xf32> to vector<128x2xf32>
    %104 = arith.subf %102, %103 : vector<128x2xf32>
    %105 = vector.extract_strided_slice %99 {offsets = [0, 2], sizes = [128, 2], strides = [1, 1]} : vector<128x4xf32> to vector<128x2xf32>
    %106 = math.sqrt %105 : vector<128x2xf32>
    %107 = vector.extract_strided_slice %101 {offsets = [0, 2], sizes = [128, 2], strides = [1, 1]} : vector<128x4xf32> to vector<128x2xf32>
    %108 = math.sqrt %107 : vector<128x2xf32>
    %109 = arith.subf %106, %108 : vector<128x2xf32>
    %110 = arith.mulf %104, %104 : vector<128x2xf32>
    %111 = arith.mulf %109, %109 : vector<128x2xf32>
    %112 = arith.addf %110, %111 : vector<128x2xf32>
    %c0_15 = arith.constant 0 : index
    %c20_16 = arith.constant 20 : index
    %113 = vector.load %arg1[%c0_15, %c20_16] : memref<128x30xf32, #tpu.memory_space<vmem>>, vector<128x1xf32>
    %c0_17 = arith.constant 0 : index
    %c25 = arith.constant 25 : index
    %114 = vector.load %arg1[%c0_17, %c25] : memref<128x30xf32, #tpu.memory_space<vmem>>, vector<128x1xf32>
    %115 = arith.mulf %87, %114 : vector<128x1xf32>
    %116 = arith.mulf %89, %113 : vector<128x1xf32>
    %117 = arith.addf %115, %116 : vector<128x1xf32>
    %118 = arith.mulf %90, %117 : vector<128x1xf32>
    %119 = arith.mulf %90, %90 : vector<128x1xf32>
    %120 = arith.subf %118, %119 : vector<128x1xf32>
    %121 = arith.subf %113, %90 : vector<128x1xf32>
    %122 = arith.mulf %92, %121 : vector<128x1xf32>
    %123 = arith.subf %114, %90 : vector<128x1xf32>
    %124 = arith.mulf %92, %123 : vector<128x1xf32>
    %c0_18 = arith.constant 0 : index
    %c0_19 = arith.constant 0 : index
    %125 = vector.load %arg1[%c0_18, %c0_19] : memref<128x30xf32, #tpu.memory_space<vmem>>, vector<128x20xf32>
    %c0_20 = arith.constant 0 : index
    %c0_21 = arith.constant 0 : index
    %126 = vector.load %arg2[%c0_20, %c0_21] : memref<128x30xf32, #tpu.memory_space<vmem>>, vector<128x20xf32>
    %127 = arith.subf %125, %126 : vector<128x20xf32>
    %128 = vector.broadcast %90 : vector<128x1xf32> to vector<128x20xf32>
    %129 = arith.mulf %128, %127 : vector<128x20xf32>
    %130 = vector.extract_strided_slice %112 {offsets = [0, 0], sizes = [128, 1], strides = [1, 1]} : vector<128x2xf32> to vector<128x1xf32>
    %131 = vector.extract_strided_slice %112 {offsets = [0, 1], sizes = [128, 1], strides = [1, 1]} : vector<128x2xf32> to vector<128x1xf32>
    %132 = arith.addf %130, %131 : vector<128x1xf32>
    %cst_22 = arith.constant 5.000000e+00 : f32
    %133 = vector.broadcast %cst_22 : f32 to vector<128x1xf32>
    %134 = arith.mulf %133, %132 : vector<128x1xf32>
    %135 = arith.mulf %120, %120 : vector<128x1xf32>
    %136 = arith.addf %134, %135 : vector<128x1xf32>
    %137 = arith.mulf %122, %122 : vector<128x1xf32>
    %138 = arith.mulf %124, %124 : vector<128x1xf32>
    %139 = arith.addf %137, %138 : vector<128x1xf32>
    %cst_23 = arith.constant 5.000000e-01 : f32
    %140 = vector.broadcast %cst_23 : f32 to vector<128x1xf32>
    %141 = arith.mulf %140, %139 : vector<128x1xf32>
    %142 = arith.addf %136, %141 : vector<128x1xf32>
    %143 = arith.mulf %129, %129 : vector<128x20xf32>
    %cst_24 = arith.constant dense<0.000000e+00> : vector<128xf32>
    %144 = vector.multi_reduction <add>, %143, %cst_24 [1] : vector<128x20xf32> to vector<128xf32>
    %145 = vector.shape_cast %144 : vector<128xf32> to vector<128x1xf32>
    %146 = arith.addf %142, %145 : vector<128x1xf32>
    %147 = vector.shape_cast %146 : vector<128x1xf32> to vector<1x128x1xf32>
    %cst_25 = arith.constant dense<0.000000e+00> : vector<1xf32>
    %148 = vector.multi_reduction <add>, %147, %cst_25 [1, 2] : vector<1x128x1xf32> to vector<1xf32>
    %149 = vector.shape_cast %148 : vector<1xf32> to vector<1x1x1xf32>
    %150 = vector.extract %149[0, 0, 0] : f32 from vector<1x1x1xf32>
    %c0_i32 = arith.constant 0 : i32
    %151 = arith.cmpi eq, %arg0, %c0_i32 : i32
    %152 = arith.extui %151 : i1 to i32
    %c0_i32_26 = arith.constant 0 : i32
    %153 = arith.cmpi ne, %152, %c0_i32_26 : i32
    scf.if %153 {
      %cst_31 = arith.constant 0.000000e+00 : f32
      %c0_32 = arith.constant 0 : index
      %c0_33 = arith.constant 0 : index
      %157 = memref.load %arg3[%c0_32, %c0_33] : memref<1x1xf32, #tpu.memory_space<smem>>
      memref.store %cst_31, %arg3[%c0_32, %c0_33] : memref<1x1xf32, #tpu.memory_space<smem>>
    } else {
    }
    %c0_27 = arith.constant 0 : index
    %c0_28 = arith.constant 0 : index
    %154 = memref.load %arg3[%c0_27, %c0_28] : memref<1x1xf32, #tpu.memory_space<smem>>
    %155 = arith.addf %154, %150 : f32
    %c0_29 = arith.constant 0 : index
    %c0_30 = arith.constant 0 : index
    %156 = memref.load %arg3[%c0_29, %c0_30] : memref<1x1xf32, #tpu.memory_space<smem>>
    memref.store %155, %arg3[%c0_29, %c0_30] : memref<1x1xf32, #tpu.memory_space<smem>>
    return
  }
  func.func @transform_0(%arg0: i32) -> (i32, i32) {
    %c0_i32 = arith.constant 0 : i32
    %c0_i32_0 = arith.constant 0 : i32
    return %arg0, %c0_i32 : i32, i32
  }
  func.func @transform_1(%arg0: i32) -> (i32, i32) {
    %c0_i32 = arith.constant 0 : i32
    %c0_i32_0 = arith.constant 0 : i32
    return %arg0, %c0_i32 : i32, i32
  }
  func.func @transform_2(%arg0: i32) -> (i32, i32) {
    %c0_i32 = arith.constant 0 : i32
    %c0_i32_0 = arith.constant 0 : i32
    %c0_i32_1 = arith.constant 0 : i32
    return %c0_i32, %c0_i32_0 : i32, i32
  }
}

</mosaic_0001>

<llo_original>
// kernel: tpu_custom_call.1
$region0: #{tpu_custom_call.1}
  #allocation0 [shape = 'u32[]', space=smem, size = 0x4, offset = 0x4, fixed_abs, tag = 'smem constant byte address 0x4 - core index']
  #allocation1 [shape = 'u32[144,128]{1,0:T(1,128)}', space=vmem, size = 0x12000, scoped, tag = 'internal scratch']
  %s0 = inlined_call_operand.vmem [shape: f32[128,30], index: 0, kind: input, shape index: {}]
  %s1 = inlined_call_operand.vmem [shape: f32[128,30], index: 1, kind: input, shape index: {}]
  %s2 = inlined_call_operand.hbm [shape: f32[1,1], index: 2, kind: output, shape index: {}]
  %s3 = sld [smem:[#allocation0]]
  $region22: #{tpu_custom_call.1} parent=0
    _
  %s5 = ssub.s32 1, %s3
  %s6 = scalar_select 0, %s5, %s3
  $region1: #{tpu_custom_call.1} parent=0
    #allocation2 [shape = 'u8[512]{0}', space=smem, size = 0x200, scoped, tag = 'output window, operand 0, single buffered']
    #allocation3 [shape = 's32[1]{0}', space=sflag, size = 0x4, scoped, tag = 'scoped memory for tpu_custom_call.1']
    %7 = vsyncpa [#allocation3], 0
    // Predicated region
    $region2: #{tpu_custom_call.1} parent=1 // pred_check
      _
    $region3: #{tpu_custom_call.1} parent=1 // pred_check_branch
      %9 = sbr.rel (0) target = $region5
    $region4: #{tpu_custom_call.1} parent=1 // pred_region
      _
    $region5: #{tpu_custom_call.1} parent=1 // pred_fallthru
      _
    // Predicated region
    $region6: #{tpu_custom_call.1} parent=1 // pred_check
      _
    $region7: #{tpu_custom_call.1} parent=1 // pred_check_branch
      %11 = sbr.rel (0) target = $region9
    $region8: #{tpu_custom_call.1} parent=1 // pred_region
      _
    $region9: #{tpu_custom_call.1} parent=1 // pred_fallthru
      _
    %v12 = vld [vmem:[%s0] sm:$0xff]
    %v13 = vld [vmem:[%s0 + $0x8] sm:$0xff]
    %v14 = vld [vmem:[%s0 + $0x10] sm:$0xff]
    %v15 = vld [vmem:[%s0 + $0x18] sm:$0xff]
    %v16 = vld [vmem:[%s0 + $0x20] sm:$0xff]
    %v17 = vld [vmem:[%s0 + $0x28] sm:$0xff]
    %v18 = vld [vmem:[%s0 + $0x30] sm:$0xff]
    %v19 = vld [vmem:[%s0 + $0x38] sm:$0xff]
    %v20 = vld [vmem:[%s0 + $0x40] sm:$0xff]
    %v21 = vld [vmem:[%s0 + $0x48] sm:$0xff]
    %v22 = vld [vmem:[%s0 + $0x50] sm:$0xff]
    %v23 = vld [vmem:[%s0 + $0x58] sm:$0xff]
    %v24 = vld [vmem:[%s0 + $0x60] sm:$0xff]
    %v25 = vld [vmem:[%s0 + $0x68] sm:$0xff]
    %v26 = vld [vmem:[%s0 + $0x70] sm:$0xff]
    %v27 = vld [vmem:[%s0 + $0x78] sm:$0xff]
    %v28 = vld [vmem:[%s1] sm:$0xff]
    %v29 = vld [vmem:[%s1 + $0x8] sm:$0xff]
    %v30 = vld [vmem:[%s1 + $0x10] sm:$0xff]
    %v31 = vld [vmem:[%s1 + $0x18] sm:$0xff]
    %v32 = vld [vmem:[%s1 + $0x20] sm:$0xff]
    %v33 = vld [vmem:[%s1 + $0x28] sm:$0xff]
    %v34 = vld [vmem:[%s1 + $0x30] sm:$0xff]
    %v35 = vld [vmem:[%s1 + $0x38] sm:$0xff]
    %v36 = vld [vmem:[%s1 + $0x40] sm:$0xff]
    %v37 = vld [vmem:[%s1 + $0x48] sm:$0xff]
    %v38 = vld [vmem:[%s1 + $0x50] sm:$0xff]
    %v39 = vld [vmem:[%s1 + $0x58] sm:$0xff]
    %v40 = vld [vmem:[%s1 + $0x60] sm:$0xff]
    %v41 = vld [vmem:[%s1 + $0x68] sm:$0xff]
    %v42 = vld [vmem:[%s1 + $0x70] sm:$0xff]
    %v43 = vld [vmem:[%s1 + $0x78] sm:$0xff]
    %v44 = vmul.f32 %v28, 0.5
    %v45 = vmul.f32 %v29, 0.5
    %v46 = vmul.f32 %v30, 0.5
    %v47 = vmul.f32 %v31, 0.5
    %v48 = vmul.f32 %v32, 0.5
    %v49 = vmul.f32 %v33, 0.5
    %v50 = vmul.f32 %v34, 0.5
    %v51 = vmul.f32 %v35, 0.5
    %v52 = vmul.f32 %v36, 0.5
    %v53 = vmul.f32 %v37, 0.5
    %v54 = vmul.f32 %v38, 0.5
    %v55 = vmul.f32 %v39, 0.5
    %v56 = vmul.f32 %v40, 0.5
    %v57 = vmul.f32 %v41, 0.5
    %v58 = vmul.f32 %v42, 0.5
    %v59 = vmul.f32 %v43, 0.5
    %76 = vrot.lane.b32.xlu0 %v44, 126
    %v77 = vpop.permute.xlu0 %76
    %78 = vrot.lane.b32.xlu0 %v45, 126
    %v79 = vpop.permute.xlu0 %78
    %80 = vrot.lane.b32.xlu0 %v46, 126
    %v81 = vpop.permute.xlu0 %80
    %82 = vrot.lane.b32.xlu0 %v47, 126
    %v83 = vpop.permute.xlu0 %82
    %84 = vrot.lane.b32.xlu0 %v48, 126
    %v85 = vpop.permute.xlu0 %84
    %86 = vrot.lane.b32.xlu0 %v49, 126
    %v87 = vpop.permute.xlu0 %86
    %88 = vrot.lane.b32.xlu0 %v50, 126
    %v89 = vpop.permute.xlu0 %88
    %90 = vrot.lane.b32.xlu0 %v51, 126
    %v91 = vpop.permute.xlu0 %90
    %92 = vrot.lane.b32.xlu0 %v52, 126
    %v93 = vpop.permute.xlu0 %92
    %94 = vrot.lane.b32.xlu0 %v53, 126
    %v95 = vpop.permute.xlu0 %94
    %96 = vrot.lane.b32.xlu0 %v54, 126
    %v97 = vpop.permute.xlu0 %96
    %98 = vrot.lane.b32.xlu0 %v55, 126
    %v99 = vpop.permute.xlu0 %98
    %100 = vrot.lane.b32.xlu0 %v56, 126
    %v101 = vpop.permute.xlu0 %100
    %102 = vrot.lane.b32.xlu0 %v57, 126
    %v103 = vpop.permute.xlu0 %102
    %104 = vrot.lane.b32.xlu0 %v58, 126
    %v105 = vpop.permute.xlu0 %104
    %106 = vrot.lane.b32.xlu0 %v59, 126
    %v107 = vpop.permute.xlu0 %106
    %v124 = vsub.f32 %v28, %v77
    %v125 = vsub.f32 %v29, %v79
    %v126 = vsub.f32 %v30, %v81
    %v127 = vsub.f32 %v31, %v83
    %v128 = vsub.f32 %v32, %v85
    %v129 = vsub.f32 %v33, %v87
    %v130 = vsub.f32 %v34, %v89
    %v131 = vsub.f32 %v35, %v91
    %v132 = vsub.f32 %v36, %v93
    %v133 = vsub.f32 %v37, %v95
    %v134 = vsub.f32 %v38, %v97
    %v135 = vsub.f32 %v39, %v99
    %v136 = vsub.f32 %v40, %v101
    %v137 = vsub.f32 %v41, %v103
    %v138 = vsub.f32 %v42, %v105
    %v139 = vsub.f32 %v43, %v107
    %v140 = vadd.f32 %v28, %v77
    %v141 = vadd.f32 %v29, %v79
    %v142 = vadd.f32 %v30, %v81
    %v143 = vadd.f32 %v31, %v83
    %v144 = vadd.f32 %v32, %v85
    %v145 = vadd.f32 %v33, %v87
    %v146 = vadd.f32 %v34, %v89
    %v147 = vadd.f32 %v35, %v91
    %v148 = vadd.f32 %v36, %v93
    %v149 = vadd.f32 %v37, %v95
    %v150 = vadd.f32 %v38, %v97
    %v151 = vadd.f32 %v39, %v99
    %v152 = vadd.f32 %v40, %v101
    %v153 = vadd.f32 %v41, %v103
    %v154 = vadd.f32 %v42, %v105
    %v155 = vadd.f32 %v43, %v107
    %v156 = vsub.f32 %v140, %v124
    %v157 = vsub.f32 %v141, %v125
    %v158 = vsub.f32 %v142, %v126
    %v159 = vsub.f32 %v143, %v127
    %v160 = vsub.f32 %v144, %v128
    %v161 = vsub.f32 %v145, %v129
    %v162 = vsub.f32 %v146, %v130
    %v163 = vsub.f32 %v147, %v131
    %v164 = vsub.f32 %v148, %v132
    %v165 = vsub.f32 %v149, %v133
    %v166 = vsub.f32 %v150, %v134
    %v167 = vsub.f32 %v151, %v135
    %v168 = vsub.f32 %v152, %v136
    %v169 = vsub.f32 %v153, %v137
    %v170 = vsub.f32 %v154, %v138
    %v171 = vsub.f32 %v155, %v139
    %188 = vrot.lane.b32.xlu0 %v156, 127
    %v189 = vpop.permute.xlu0 %188
    %190 = vrot.lane.b32.xlu0 %v157, 127
    %v191 = vpop.permute.xlu0 %190
    %192 = vrot.lane.b32.xlu0 %v158, 127
    %v193 = vpop.permute.xlu0 %192
    %194 = vrot.lane.b32.xlu0 %v159, 127
    %v195 = vpop.permute.xlu0 %194
    %196 = vrot.lane.b32.xlu0 %v160, 127
    %v197 = vpop.permute.xlu0 %196
    %198 = vrot.lane.b32.xlu0 %v161, 127
    %v199 = vpop.permute.xlu0 %198
    %200 = vrot.lane.b32.xlu0 %v162, 127
    %v201 = vpop.permute.xlu0 %200
    %202 = vrot.lane.b32.xlu0 %v163, 127
    %v203 = vpop.permute.xlu0 %202
    %204 = vrot.lane.b32.xlu0 %v164, 127
    %v205 = vpop.permute.xlu0 %204
    %206 = vrot.lane.b32.xlu0 %v165, 127
    %v207 = vpop.permute.xlu0 %206
    %208 = vrot.lane.b32.xlu0 %v166, 127
    %v209 = vpop.permute.xlu0 %208
    %210 = vrot.lane.b32.xlu0 %v167, 127
    %v211 = vpop.permute.xlu0 %210
    %212 = vrot.lane.b32.xlu0 %v168, 127
    %v213 = vpop.permute.xlu0 %212
    %214 = vrot.lane.b32.xlu0 %v169, 127
    %v215 = vpop.permute.xlu0 %214
    %216 = vrot.lane.b32.xlu0 %v170, 127
    %v217 = vpop.permute.xlu0 %216
    %218 = vrot.lane.b32.xlu0 %v171, 127
    %v219 = vpop.permute.xlu0 %218
    %v236 = vmul.f32 %v156, %v189
    %v237 = vmul.f32 %v157, %v191
    %v238 = vmul.f32 %v158, %v193
    %v239 = vmul.f32 %v159, %v195
    %v240 = vmul.f32 %v160, %v197
    %v241 = vmul.f32 %v161, %v199
    %v242 = vmul.f32 %v162, %v201
    %v243 = vmul.f32 %v163, %v203
    %v244 = vmul.f32 %v164, %v205
    %v245 = vmul.f32 %v165, %v207
    %v246 = vmul.f32 %v166, %v209
    %v247 = vmul.f32 %v167, %v211
    %v248 = vmul.f32 %v168, %v213
    %v249 = vmul.f32 %v169, %v215
    %v250 = vmul.f32 %v170, %v217
    %v251 = vmul.f32 %v171, %v219
    %v252 = vand.u32 2147483647, %v236
    %v253 = vand.u32 2147483647, %v237
    %v254 = vand.u32 2147483647, %v238
    %v255 = vand.u32 2147483647, %v239
    %v256 = vand.u32 2147483647, %v240
    %v257 = vand.u32 2147483647, %v241
    %v258 = vand.u32 2147483647, %v242
    %v259 = vand.u32 2147483647, %v243
    %v260 = vand.u32 2147483647, %v244
    %v261 = vand.u32 2147483647, %v245
    %v262 = vand.u32 2147483647, %v246
    %v263 = vand.u32 2147483647, %v247
    %v264 = vand.u32 2147483647, %v248
    %v265 = vand.u32 2147483647, %v249
    %v266 = vand.u32 2147483647, %v250
    %v267 = vand.u32 2147483647, %v251
    %v268 = vmul.f32 %v12, 0.5
    %v269 = vmul.f32 %v13, 0.5
    %v270 = vmul.f32 %v14, 0.5
    %v271 = vmul.f32 %v15, 0.5
    %v272 = vmul.f32 %v16, 0.5
    %v273 = vmul.f32 %v17, 0.5
    %v274 = vmul.f32 %v18, 0.5
    %v275 = vmul.f32 %v19, 0.5
    %v276 = vmul.f32 %v20, 0.5
    %v277 = vmul.f32 %v21, 0.5
    %v278 = vmul.f32 %v22, 0.5
    %v279 = vmul.f32 %v23, 0.5
    %v280 = vmul.f32 %v24, 0.5
    %v281 = vmul.f32 %v25, 0.5
    %v282 = vmul.f32 %v26, 0.5
    %v283 = vmul.f32 %v27, 0.5
    %300 = vrot.lane.b32.xlu0 %v268, 126
    %v301 = vpop.permute.xlu0 %300
    %302 = vrot.lane.b32.xlu0 %v269, 126
    %v303 = vpop.permute.xlu0 %302
    %304 = vrot.lane.b32.xlu0 %v270, 126
    %v305 = vpop.permute.xlu0 %304
    %306 = vrot.lane.b32.xlu0 %v271, 126
    %v307 = vpop.permute.xlu0 %306
    %308 = vrot.lane.b32.xlu0 %v272, 126
    %v309 = vpop.permute.xlu0 %308
    %310 = vrot.lane.b32.xlu0 %v273, 126
    %v311 = vpop.permute.xlu0 %310
    %312 = vrot.lane.b32.xlu0 %v274, 126
    %v313 = vpop.permute.xlu0 %312
    %314 = vrot.lane.b32.xlu0 %v275, 126
    %v315 = vpop.permute.xlu0 %314
    %316 = vrot.lane.b32.xlu0 %v276, 126
    %v317 = vpop.permute.xlu0 %316
    %318 = vrot.lane.b32.xlu0 %v277, 126
    %v319 = vpop.permute.xlu0 %318
    %320 = vrot.lane.b32.xlu0 %v278, 126
    %v321 = vpop.permute.xlu0 %320
    %322 = vrot.lane.b32.xlu0 %v279, 126
    %v323 = vpop.permute.xlu0 %322
    %324 = vrot.lane.b32.xlu0 %v280, 126
    %v325 = vpop.permute.xlu0 %324
    %326 = vrot.lane.b32.xlu0 %v281, 126
    %v327 = vpop.permute.xlu0 %326
    %328 = vrot.lane.b32.xlu0 %v282, 126
    %v329 = vpop.permute.xlu0 %328
    %330 = vrot.lane.b32.xlu0 %v283, 126
    %v331 = vpop.permute.xlu0 %330
    %v348 = vsub.f32 %v12, %v301
    %v349 = vsub.f32 %v13, %v303
    %v350 = vsub.f32 %v14, %v305
    %v351 = vsub.f32 %v15, %v307
    %v352 = vsub.f32 %v16, %v309
    %v353 = vsub.f32 %v17, %v311
    %v354 = vsub.f32 %v18, %v313
    %v355 = vsub.f32 %v19, %v315
    %v356 = vsub.f32 %v20, %v317
    %v357 = vsub.f32 %v21, %v319
    %v358 = vsub.f32 %v22, %v321
    %v359 = vsub.f32 %v23, %v323
    %v360 = vsub.f32 %v24, %v325
    %v361 = vsub.f32 %v25, %v327
    %v362 = vsub.f32 %v26, %v329
    %v363 = vsub.f32 %v27, %v331
    %v364 = vadd.f32 %v12, %v301
    %v365 = vadd.f32 %v13, %v303
    %v366 = vadd.f32 %v14, %v305
    %v367 = vadd.f32 %v15, %v307
    %v368 = vadd.f32 %v16, %v309
    %v369 = vadd.f32 %v17, %v311
    %v370 = vadd.f32 %v18, %v313
    %v371 = vadd.f32 %v19, %v315
    %v372 = vadd.f32 %v20, %v317
    %v373 = vadd.f32 %v21, %v319
    %v374 = vadd.f32 %v22, %v321
    %v375 = vadd.f32 %v23, %v323
    %v376 = vadd.f32 %v24, %v325
    %v377 = vadd.f32 %v25, %v327
    %v378 = vadd.f32 %v26, %v329
    %v379 = vadd.f32 %v27, %v331
    %v380 = vmin.f32 %v364, %v140
    %v381 = vmin.f32 %v365, %v141
    %v382 = vmin.f32 %v366, %v142
    %v383 = vmin.f32 %v367, %v143
    %v384 = vmin.f32 %v368, %v144
    %v385 = vmin.f32 %v369, %v145
    %v386 = vmin.f32 %v370, %v146
    %v387 = vmin.f32 %v371, %v147
    %v388 = vmin.f32 %v372, %v148
    %v389 = vmin.f32 %v373, %v149
    %v390 = vmin.f32 %v374, %v150
    %v391 = vmin.f32 %v375, %v151
    %v392 = vmin.f32 %v376, %v152
    %v393 = vmin.f32 %v377, %v153
    %v394 = vmin.f32 %v378, %v154
    %v395 = vmin.f32 %v379, %v155
    %v396 = vmax.f32 %v348, %v124
    %v397 = vmax.f32 %v349, %v125
    %v398 = vmax.f32 %v350, %v126
    %v399 = vmax.f32 %v351, %v127
    %v400 = vmax.f32 %v352, %v128
    %v401 = vmax.f32 %v353, %v129
    %v402 = vmax.f32 %v354, %v130
    %v403 = vmax.f32 %v355, %v131
    %v404 = vmax.f32 %v356, %v132
    %v405 = vmax.f32 %v357, %v133
    %v406 = vmax.f32 %v358, %v134
    %v407 = vmax.f32 %v359, %v135
    %v408 = vmax.f32 %v360, %v136
    %v409 = vmax.f32 %v361, %v137
    %v410 = vmax.f32 %v362, %v138
    %v411 = vmax.f32 %v363, %v139
    %v412 = vsub.f32 %v380, %v396
    %v413 = vsub.f32 %v381, %v397
    %v414 = vsub.f32 %v382, %v398
    %v415 = vsub.f32 %v383, %v399
    %v416 = vsub.f32 %v384, %v400
    %v417 = vsub.f32 %v385, %v401
    %v418 = vsub.f32 %v386, %v402
    %v419 = vsub.f32 %v387, %v403
    %v420 = vsub.f32 %v388, %v404
    %v421 = vsub.f32 %v389, %v405
    %v422 = vsub.f32 %v390, %v406
    %v423 = vsub.f32 %v391, %v407
    %v424 = vsub.f32 %v392, %v408
    %v425 = vsub.f32 %v393, %v409
    %v426 = vsub.f32 %v394, %v410
    %v427 = vsub.f32 %v395, %v411
    %v428 = vmax.f32 %v412, 0.0
    %v429 = vmax.f32 %v413, 0.0
    %v430 = vmax.f32 %v414, 0.0
    %v431 = vmax.f32 %v415, 0.0
    %v432 = vmax.f32 %v416, 0.0
    %v433 = vmax.f32 %v417, 0.0
    %v434 = vmax.f32 %v418, 0.0
    %v435 = vmax.f32 %v419, 0.0
    %v436 = vmax.f32 %v420, 0.0
    %v437 = vmax.f32 %v421, 0.0
    %v438 = vmax.f32 %v422, 0.0
    %v439 = vmax.f32 %v423, 0.0
    %v440 = vmax.f32 %v424, 0.0
    %v441 = vmax.f32 %v425, 0.0
    %v442 = vmax.f32 %v426, 0.0
    %v443 = vmax.f32 %v427, 0.0
    %460 = vrot.lane.b32.xlu0 %v428, 127
    %v461 = vpop.permute.xlu0 %460
    %462 = vrot.lane.b32.xlu0 %v429, 127
    %v463 = vpop.permute.xlu0 %462
    %464 = vrot.lane.b32.xlu0 %v430, 127
    %v465 = vpop.permute.xlu0 %464
    %466 = vrot.lane.b32.xlu0 %v431, 127
    %v467 = vpop.permute.xlu0 %466
    %468 = vrot.lane.b32.xlu0 %v432, 127
    %v469 = vpop.permute.xlu0 %468
    %470 = vrot.lane.b32.xlu0 %v433, 127
    %v471 = vpop.permute.xlu0 %470
    %472 = vrot.lane.b32.xlu0 %v434, 127
    %v473 = vpop.permute.xlu0 %472
    %474 = vrot.lane.b32.xlu0 %v435, 127
    %v475 = vpop.permute.xlu0 %474
    %476 = vrot.lane.b32.xlu0 %v436, 127
    %v477 = vpop.permute.xlu0 %476
    %478 = vrot.lane.b32.xlu0 %v437, 127
    %v479 = vpop.permute.xlu0 %478
    %480 = vrot.lane.b32.xlu0 %v438, 127
    %v481 = vpop.permute.xlu0 %480
    %482 = vrot.lane.b32.xlu0 %v439, 127
    %v483 = vpop.permute.xlu0 %482
    %484 = vrot.lane.b32.xlu0 %v440, 127
    %v485 = vpop.permute.xlu0 %484
    %486 = vrot.lane.b32.xlu0 %v441, 127
    %v487 = vpop.permute.xlu0 %486
    %488 = vrot.lane.b32.xlu0 %v442, 127
    %v489 = vpop.permute.xlu0 %488
    %490 = vrot.lane.b32.xlu0 %v443, 127
    %v491 = vpop.permute.xlu0 %490
    %v508 = vmul.f32 %v428, %v461
    %v509 = vmul.f32 %v429, %v463
    %v510 = vmul.f32 %v430, %v465
    %v511 = vmul.f32 %v431, %v467
    %v512 = vmul.f32 %v432, %v469
    %v513 = vmul.f32 %v433, %v471
    %v514 = vmul.f32 %v434, %v473
    %v515 = vmul.f32 %v435, %v475
    %v516 = vmul.f32 %v436, %v477
    %v517 = vmul.f32 %v437, %v479
    %v518 = vmul.f32 %v438, %v481
    %v519 = vmul.f32 %v439, %v483
    %v520 = vmul.f32 %v440, %v485
    %v521 = vmul.f32 %v441, %v487
    %v522 = vmul.f32 %v442, %v489
    %v523 = vmul.f32 %v443, %v491
    %v524 = vsub.f32 %v364, %v348
    %v525 = vsub.f32 %v365, %v349
    %v526 = vsub.f32 %v366, %v350
    %v527 = vsub.f32 %v367, %v351
    %v528 = vsub.f32 %v368, %v352
    %v529 = vsub.f32 %v369, %v353
    %v530 = vsub.f32 %v370, %v354
    %v531 = vsub.f32 %v371, %v355
    %v532 = vsub.f32 %v372, %v356
    %v533 = vsub.f32 %v373, %v357
    %v534 = vsub.f32 %v374, %v358
    %v535 = vsub.f32 %v375, %v359
    %v536 = vsub.f32 %v376, %v360
    %v537 = vsub.f32 %v377, %v361
    %v538 = vsub.f32 %v378, %v362
    %v539 = vsub.f32 %v379, %v363
    %556 = vrot.lane.b32.xlu0 %v524, 127
    %v557 = vpop.permute.xlu0 %556
    %558 = vrot.lane.b32.xlu0 %v525, 127
    %v559 = vpop.permute.xlu0 %558
    %560 = vrot.lane.b32.xlu0 %v526, 127
    %v561 = vpop.permute.xlu0 %560
    %562 = vrot.lane.b32.xlu0 %v527, 127
    %v563 = vpop.permute.xlu0 %562
    %564 = vrot.lane.b32.xlu0 %v528, 127
    %v565 = vpop.permute.xlu0 %564
    %566 = vrot.lane.b32.xlu0 %v529, 127
    %v567 = vpop.permute.xlu0 %566
    %568 = vrot.lane.b32.xlu0 %v530, 127
    %v569 = vpop.permute.xlu0 %568
    %570 = vrot.lane.b32.xlu0 %v531, 127
    %v571 = vpop.permute.xlu0 %570
    %572 = vrot.lane.b32.xlu0 %v532, 127
    %v573 = vpop.permute.xlu0 %572
    %574 = vrot.lane.b32.xlu0 %v533, 127
    %v575 = vpop.permute.xlu0 %574
    %576 = vrot.lane.b32.xlu0 %v534, 127
    %v577 = vpop.permute.xlu0 %576
    %578 = vrot.lane.b32.xlu0 %v535, 127
    %v579 = vpop.permute.xlu0 %578
    %580 = vrot.lane.b32.xlu0 %v536, 127
    %v581 = vpop.permute.xlu0 %580
    %582 = vrot.lane.b32.xlu0 %v537, 127
    %v583 = vpop.permute.xlu0 %582
    %584 = vrot.lane.b32.xlu0 %v538, 127
    %v585 = vpop.permute.xlu0 %584
    %586 = vrot.lane.b32.xlu0 %v539, 127
    %v587 = vpop.permute.xlu0 %586
    %v604 = vmul.f32 %v524, %v557
    %v605 = vmul.f32 %v525, %v559
    %v606 = vmul.f32 %v526, %v561
    %v607 = vmul.f32 %v527, %v563
    %v608 = vmul.f32 %v528, %v565
    %v609 = vmul.f32 %v529, %v567
    %v610 = vmul.f32 %v530, %v569
    %v611 = vmul.f32 %v531, %v571
    %v612 = vmul.f32 %v532, %v573
    %v613 = vmul.f32 %v533, %v575
    %v614 = vmul.f32 %v534, %v577
    %v615 = vmul.f32 %v535, %v579
    %v616 = vmul.f32 %v536, %v581
    %v617 = vmul.f32 %v537, %v583
    %v618 = vmul.f32 %v538, %v585
    %v619 = vmul.f32 %v539, %v587
    %v620 = vand.u32 2147483647, %v604
    %v621 = vand.u32 2147483647, %v605
    %v622 = vand.u32 2147483647, %v606
    %v623 = vand.u32 2147483647, %v607
    %v624 = vand.u32 2147483647, %v608
    %v625 = vand.u32 2147483647, %v609
    %v626 = vand.u32 2147483647, %v610
    %v627 = vand.u32 2147483647, %v611
    %v628 = vand.u32 2147483647, %v612
    %v629 = vand.u32 2147483647, %v613
    %v630 = vand.u32 2147483647, %v614
    %v631 = vand.u32 2147483647, %v615
    %v632 = vand.u32 2147483647, %v616
    %v633 = vand.u32 2147483647, %v617
    %v634 = vand.u32 2147483647, %v618
    %v635 = vand.u32 2147483647, %v619
    %v636 = vadd.f32 %v620, %v252
    %v637 = vadd.f32 %v621, %v253
    %v638 = vadd.f32 %v622, %v254
    %v639 = vadd.f32 %v623, %v255
    %v640 = vadd.f32 %v624, %v256
    %v641 = vadd.f32 %v625, %v257
    %v642 = vadd.f32 %v626, %v258
    %v643 = vadd.f32 %v627, %v259
    %v644 = vadd.f32 %v628, %v260
    %v645 = vadd.f32 %v629, %v261
    %v646 = vadd.f32 %v630, %v262
    %v647 = vadd.f32 %v631, %v263
    %v648 = vadd.f32 %v632, %v264
    %v649 = vadd.f32 %v633, %v265
    %v650 = vadd.f32 %v634, %v266
    %v651 = vadd.f32 %v635, %v267
    %v652 = vsub.f32 %v636, %v508
    %v653 = vsub.f32 %v637, %v509
    %v654 = vsub.f32 %v638, %v510
    %v655 = vsub.f32 %v639, %v511
    %v656 = vsub.f32 %v640, %v512
    %v657 = vsub.f32 %v641, %v513
    %v658 = vsub.f32 %v642, %v514
    %v659 = vsub.f32 %v643, %v515
    %v660 = vsub.f32 %v644, %v516
    %v661 = vsub.f32 %v645, %v517
    %v662 = vsub.f32 %v646, %v518
    %v663 = vsub.f32 %v647, %v519
    %v664 = vsub.f32 %v648, %v520
    %v665 = vsub.f32 %v649, %v521
    %v666 = vsub.f32 %v650, %v522
    %v667 = vsub.f32 %v651, %v523
    %v668 = vadd.f32 %v652, 1e-06
    %v669 = vadd.f32 %v653, 1e-06
    %v670 = vadd.f32 %v654, 1e-06
    %v671 = vadd.f32 %v655, 1e-06
    %v672 = vadd.f32 %v656, 1e-06
    %v673 = vadd.f32 %v657, 1e-06
    %v674 = vadd.f32 %v658, 1e-06
    %v675 = vadd.f32 %v659, 1e-06
    %v676 = vadd.f32 %v660, 1e-06
    %v677 = vadd.f32 %v661, 1e-06
    %v678 = vadd.f32 %v662, 1e-06
    %v679 = vadd.f32 %v663, 1e-06
    %v680 = vadd.f32 %v664, 1e-06
    %v681 = vadd.f32 %v665, 1e-06
    %v682 = vadd.f32 %v666, 1e-06
    %v683 = vadd.f32 %v667, 1e-06
    %v684 = vrcp.pop %v668
    %v685 = vrcp.pop %v669
    %v686 = vrcp.pop %v670
    %v687 = vrcp.pop %v671
    %v688 = vrcp.pop %v672
    %v689 = vrcp.pop %v673
    %v690 = vrcp.pop %v674
    %v691 = vrcp.pop %v675
    %v692 = vrcp.pop %v676
    %v693 = vrcp.pop %v677
    %v694 = vrcp.pop %v678
    %v695 = vrcp.pop %v679
    %v696 = vrcp.pop %v680
    %v697 = vrcp.pop %v681
    %v698 = vrcp.pop %v682
    %v699 = vrcp.pop %v683
    %v700 = vmul.f32 %v508, %v684
    %v701 = vmul.f32 %v509, %v685
    %v702 = vmul.f32 %v510, %v686
    %v703 = vmul.f32 %v511, %v687
    %v704 = vmul.f32 %v512, %v688
    %v705 = vmul.f32 %v513, %v689
    %v706 = vmul.f32 %v514, %v690
    %v707 = vmul.f32 %v515, %v691
    %v708 = vmul.f32 %v516, %v692
    %v709 = vmul.f32 %v517, %v693
    %v710 = vmul.f32 %v518, %v694
    %v711 = vmul.f32 %v519, %v695
    %v712 = vmul.f32 %v520, %v696
    %v713 = vmul.f32 %v521, %v697
    %v714 = vmul.f32 %v522, %v698
    %v715 = vmul.f32 %v523, %v699
    %732 = vrot.lane.b32.xlu0 %v140, 5
    %v733 = vpop.permute.xlu0 %732
    %734 = vrot.lane.b32.xlu0 %v141, 5
    %v735 = vpop.permute.xlu0 %734
    %736 = vrot.lane.b32.xlu0 %v142, 5
    %v737 = vpop.permute.xlu0 %736
    %738 = vrot.lane.b32.xlu0 %v143, 5
    %v739 = vpop.permute.xlu0 %738
    %740 = vrot.lane.b32.xlu0 %v144, 5
    %v741 = vpop.permute.xlu0 %740
    %742 = vrot.lane.b32.xlu0 %v145, 5
    %v743 = vpop.permute.xlu0 %742
    %744 = vrot.lane.b32.xlu0 %v146, 5
    %v745 = vpop.permute.xlu0 %744
    %746 = vrot.lane.b32.xlu0 %v147, 5
    %v747 = vpop.permute.xlu0 %746
    %748 = vrot.lane.b32.xlu0 %v148, 5
    %v749 = vpop.permute.xlu0 %748
    %750 = vrot.lane.b32.xlu0 %v149, 5
    %v751 = vpop.permute.xlu0 %750
    %752 = vrot.lane.b32.xlu0 %v150, 5
    %v753 = vpop.permute.xlu0 %752
    %754 = vrot.lane.b32.xlu0 %v151, 5
    %v755 = vpop.permute.xlu0 %754
    %756 = vrot.lane.b32.xlu0 %v152, 5
    %v757 = vpop.permute.xlu0 %756
    %758 = vrot.lane.b32.xlu0 %v153, 5
    %v759 = vpop.permute.xlu0 %758
    %760 = vrot.lane.b32.xlu0 %v154, 5
    %v761 = vpop.permute.xlu0 %760
    %762 = vrot.lane.b32.xlu0 %v155, 5
    %v763 = vpop.permute.xlu0 %762
    %v780 = vmin.f32 %v364, %v733
    %v781 = vmin.f32 %v365, %v735
    %v782 = vmin.f32 %v366, %v737
    %v783 = vmin.f32 %v367, %v739
    %v784 = vmin.f32 %v368, %v741
    %v785 = vmin.f32 %v369, %v743
    %v786 = vmin.f32 %v370, %v745
    %v787 = vmin.f32 %v371, %v747
    %v788 = vmin.f32 %v372, %v749
    %v789 = vmin.f32 %v373, %v751
    %v790 = vmin.f32 %v374, %v753
    %v791 = vmin.f32 %v375, %v755
    %v792 = vmin.f32 %v376, %v757
    %v793 = vmin.f32 %v377, %v759
    %v794 = vmin.f32 %v378, %v761
    %v795 = vmin.f32 %v379, %v763
    %812 = vrot.lane.b32.xlu0 %v124, 5
    %v813 = vpop.permute.xlu0 %812
    %814 = vrot.lane.b32.xlu0 %v125, 5
    %v815 = vpop.permute.xlu0 %814
    %816 = vrot.lane.b32.xlu0 %v126, 5
    %v817 = vpop.permute.xlu0 %816
    %818 = vrot.lane.b32.xlu0 %v127, 5
    %v819 = vpop.permute.xlu0 %818
    %820 = vrot.lane.b32.xlu0 %v128, 5
    %v821 = vpop.permute.xlu0 %820
    %822 = vrot.lane.b32.xlu0 %v129, 5
    %v823 = vpop.permute.xlu0 %822
    %824 = vrot.lane.b32.xlu0 %v130, 5
    %v825 = vpop.permute.xlu0 %824
    %826 = vrot.lane.b32.xlu0 %v131, 5
    %v827 = vpop.permute.xlu0 %826
    %828 = vrot.lane.b32.xlu0 %v132, 5
    %v829 = vpop.permute.xlu0 %828
    %830 = vrot.lane.b32.xlu0 %v133, 5
    %v831 = vpop.permute.xlu0 %830
    %832 = vrot.lane.b32.xlu0 %v134, 5
    %v833 = vpop.permute.xlu0 %832
    %834 = vrot.lane.b32.xlu0 %v135, 5
    %v835 = vpop.permute.xlu0 %834
    %836 = vrot.lane.b32.xlu0 %v136, 5
    %v837 = vpop.permute.xlu0 %836
    %838 = vrot.lane.b32.xlu0 %v137, 5
    %v839 = vpop.permute.xlu0 %838
    %840 = vrot.lane.b32.xlu0 %v138, 5
    %v841 = vpop.permute.xlu0 %840
    %842 = vrot.lane.b32.xlu0 %v139, 5
    %v843 = vpop.permute.xlu0 %842
    %v860 = vmax.f32 %v348, %v813
    %v861 = vmax.f32 %v349, %v815
    %v862 = vmax.f32 %v350, %v817
    %v863 = vmax.f32 %v351, %v819
    %v864 = vmax.f32 %v352, %v821
    %v865 = vmax.f32 %v353, %v823
    %v866 = vmax.f32 %v354, %v825
    %v867 = vmax.f32 %v355, %v827
    %v868 = vmax.f32 %v356, %v829
    %v869 = vmax.f32 %v357, %v831
    %v870 = vmax.f32 %v358, %v833
    %v871 = vmax.f32 %v359, %v835
    %v872 = vmax.f32 %v360, %v837
    %v873 = vmax.f32 %v361, %v839
    %v874 = vmax.f32 %v362, %v841
    %v875 = vmax.f32 %v363, %v843
    %v876 = vsub.f32 %v780, %v860
    %v877 = vsub.f32 %v781, %v861
    %v878 = vsub.f32 %v782, %v862
    %v879 = vsub.f32 %v783, %v863
    %v880 = vsub.f32 %v784, %v864
    %v881 = vsub.f32 %v785, %v865
    %v882 = vsub.f32 %v786, %v866
    %v883 = vsub.f32 %v787, %v867
    %v884 = vsub.f32 %v788, %v868
    %v885 = vsub.f32 %v789, %v869
    %v886 = vsub.f32 %v790, %v870
    %v887 = vsub.f32 %v791, %v871
    %v888 = vsub.f32 %v792, %v872
    %v889 = vsub.f32 %v793, %v873
    %v890 = vsub.f32 %v794, %v874
    %v891 = vsub.f32 %v795, %v875
    %v892 = vmax.f32 %v876, 0.0
    %v893 = vmax.f32 %v877, 0.0
    %v894 = vmax.f32 %v878, 0.0
    %v895 = vmax.f32 %v879, 0.0
    %v896 = vmax.f32 %v880, 0.0
    %v897 = vmax.f32 %v881, 0.0
    %v898 = vmax.f32 %v882, 0.0
    %v899 = vmax.f32 %v883, 0.0
    %v900 = vmax.f32 %v884, 0.0
    %v901 = vmax.f32 %v885, 0.0
    %v902 = vmax.f32 %v886, 0.0
    %v903 = vmax.f32 %v887, 0.0
    %v904 = vmax.f32 %v888, 0.0
    %v905 = vmax.f32 %v889, 0.0
    %v906 = vmax.f32 %v890, 0.0
    %v907 = vmax.f32 %v891, 0.0
    %924 = vrot.lane.b32.xlu0 %v892, 127
    %v925 = vpop.permute.xlu0 %924
    %926 = vrot.lane.b32.xlu0 %v893, 127
    %v927 = vpop.permute.xlu0 %926
    %928 = vrot.lane.b32.xlu0 %v894, 127
    %v929 = vpop.permute.xlu0 %928
    %930 = vrot.lane.b32.xlu0 %v895, 127
    %v931 = vpop.permute.xlu0 %930
    %932 = vrot.lane.b32.xlu0 %v896, 127
    %v933 = vpop.permute.xlu0 %932
    %934 = vrot.lane.b32.xlu0 %v897, 127
    %v935 = vpop.permute.xlu0 %934
    %936 = vrot.lane.b32.xlu0 %v898, 127
    %v937 = vpop.permute.xlu0 %936
    %938 = vrot.lane.b32.xlu0 %v899, 127
    %v939 = vpop.permute.xlu0 %938
    %940 = vrot.lane.b32.xlu0 %v900, 127
    %v941 = vpop.permute.xlu0 %940
    %942 = vrot.lane.b32.xlu0 %v901, 127
    %v943 = vpop.permute.xlu0 %942
    %944 = vrot.lane.b32.xlu0 %v902, 127
    %v945 = vpop.permute.xlu0 %944
    %946 = vrot.lane.b32.xlu0 %v903, 127
    %v947 = vpop.permute.xlu0 %946
    %948 = vrot.lane.b32.xlu0 %v904, 127
    %v949 = vpop.permute.xlu0 %948
    %950 = vrot.lane.b32.xlu0 %v905, 127
    %v951 = vpop.permute.xlu0 %950
    %952 = vrot.lane.b32.xlu0 %v906, 127
    %v953 = vpop.permute.xlu0 %952
    %954 = vrot.lane.b32.xlu0 %v907, 127
    %v955 = vpop.permute.xlu0 %954
    %v972 = vmul.f32 %v892, %v925
    %v973 = vmul.f32 %v893, %v927
    %v974 = vmul.f32 %v894, %v929
    %v975 = vmul.f32 %v895, %v931
    %v976 = vmul.f32 %v896, %v933
    %v977 = vmul.f32 %v897, %v935
    %v978 = vmul.f32 %v898, %v937
    %v979 = vmul.f32 %v899, %v939
    %v980 = vmul.f32 %v900, %v941
    %v981 = vmul.f32 %v901, %v943
    %v982 = vmul.f32 %v902, %v945
    %v983 = vmul.f32 %v903, %v947
    %v984 = vmul.f32 %v904, %v949
    %v985 = vmul.f32 %v905, %v951
    %v986 = vmul.f32 %v906, %v953
    %v987 = vmul.f32 %v907, %v955
    %1004 = vrot.lane.b32.xlu0 %v252, 5
    %v1005 = vpop.permute.xlu0 %1004
    %1006 = vrot.lane.b32.xlu0 %v253, 5
    %v1007 = vpop.permute.xlu0 %1006
    %1008 = vrot.lane.b32.xlu0 %v254, 5
    %v1009 = vpop.permute.xlu0 %1008
    %1010 = vrot.lane.b32.xlu0 %v255, 5
    %v1011 = vpop.permute.xlu0 %1010
    %1012 = vrot.lane.b32.xlu0 %v256, 5
    %v1013 = vpop.permute.xlu0 %1012
    %1014 = vrot.lane.b32.xlu0 %v257, 5
    %v1015 = vpop.permute.xlu0 %1014
    %1016 = vrot.lane.b32.xlu0 %v258, 5
    %v1017 = vpop.permute.xlu0 %1016
    %1018 = vrot.lane.b32.xlu0 %v259, 5
    %v1019 = vpop.permute.xlu0 %1018
    %1020 = vrot.lane.b32.xlu0 %v260, 5
    %v1021 = vpop.permute.xlu0 %1020
    %1022 = vrot.lane.b32.xlu0 %v261, 5
    %v1023 = vpop.permute.xlu0 %1022
    %1024 = vrot.lane.b32.xlu0 %v262, 5
    %v1025 = vpop.permute.xlu0 %1024
    %1026 = vrot.lane.b32.xlu0 %v263, 5
    %v1027 = vpop.permute.xlu0 %1026
    %1028 = vrot.lane.b32.xlu0 %v264, 5
    %v1029 = vpop.permute.xlu0 %1028
    %1030 = vrot.lane.b32.xlu0 %v265, 5
    %v1031 = vpop.permute.xlu0 %1030
    %1032 = vrot.lane.b32.xlu0 %v266, 5
    %v1033 = vpop.permute.xlu0 %1032
    %1034 = vrot.lane.b32.xlu0 %v267, 5
    %v1035 = vpop.permute.xlu0 %1034
    %v1052 = vadd.f32 %v620, %v1005
    %v1053 = vadd.f32 %v621, %v1007
    %v1054 = vadd.f32 %v622, %v1009
    %v1055 = vadd.f32 %v623, %v1011
    %v1056 = vadd.f32 %v624, %v1013
    %v1057 = vadd.f32 %v625, %v1015
    %v1058 = vadd.f32 %v626, %v1017
    %v1059 = vadd.f32 %v627, %v1019
    %v1060 = vadd.f32 %v628, %v1021
    %v1061 = vadd.f32 %v629, %v1023
    %v1062 = vadd.f32 %v630, %v1025
    %v1063 = vadd.f32 %v631, %v1027
    %v1064 = vadd.f32 %v632, %v1029
    %v1065 = vadd.f32 %v633, %v1031
    %v1066 = vadd.f32 %v634, %v1033
    %v1067 = vadd.f32 %v635, %v1035
    %v1068 = vsub.f32 %v1052, %v972
    %v1069 = vsub.f32 %v1053, %v973
    %v1070 = vsub.f32 %v1054, %v974
    %v1071 = vsub.f32 %v1055, %v975
    %v1072 = vsub.f32 %v1056, %v976
    %v1073 = vsub.f32 %v1057, %v977
    %v1074 = vsub.f32 %v1058, %v978
    %v1075 = vsub.f32 %v1059, %v979
    %v1076 = vsub.f32 %v1060, %v980
    %v1077 = vsub.f32 %v1061, %v981
    %v1078 = vsub.f32 %v1062, %v982
    %v1079 = vsub.f32 %v1063, %v983
    %v1080 = vsub.f32 %v1064, %v984
    %v1081 = vsub.f32 %v1065, %v985
    %v1082 = vsub.f32 %v1066, %v986
    %v1083 = vsub.f32 %v1067, %v987
    %v1084 = vadd.f32 %v1068, 1e-06
    %v1085 = vadd.f32 %v1069, 1e-06
    %v1086 = vadd.f32 %v1070, 1e-06
    %v1087 = vadd.f32 %v1071, 1e-06
    %v1088 = vadd.f32 %v1072, 1e-06
    %v1089 = vadd.f32 %v1073, 1e-06
    %v1090 = vadd.f32 %v1074, 1e-06
    %v1091 = vadd.f32 %v1075, 1e-06
    %v1092 = vadd.f32 %v1076, 1e-06
    %v1093 = vadd.f32 %v1077, 1e-06
    %v1094 = vadd.f32 %v1078, 1e-06
    %v1095 = vadd.f32 %v1079, 1e-06
    %v1096 = vadd.f32 %v1080, 1e-06
    %v1097 = vadd.f32 %v1081, 1e-06
    %v1098 = vadd.f32 %v1082, 1e-06
    %v1099 = vadd.f32 %v1083, 1e-06
    %v1100 = vrcp.pop %v1084
    %v1101 = vrcp.pop %v1085
    %v1102 = vrcp.pop %v1086
    %v1103 = vrcp.pop %v1087
    %v1104 = vrcp.pop %v1088
    %v1105 = vrcp.pop %v1089
    %v1106 = vrcp.pop %v1090
    %v1107 = vrcp.pop %v1091
    %v1108 = vrcp.pop %v1092
    %v1109 = vrcp.pop %v1093
    %v1110 = vrcp.pop %v1094
    %v1111 = vrcp.pop %v1095
    %v1112 = vrcp.pop %v1096
    %v1113 = vrcp.pop %v1097
    %v1114 = vrcp.pop %v1098
    %v1115 = vrcp.pop %v1099
    %v1116 = vmul.f32 %v972, %v1100
    %v1117 = vmul.f32 %v973, %v1101
    %v1118 = vmul.f32 %v974, %v1102
    %v1119 = vmul.f32 %v975, %v1103
    %v1120 = vmul.f32 %v976, %v1104
    %v1121 = vmul.f32 %v977, %v1105
    %v1122 = vmul.f32 %v978, %v1106
    %v1123 = vmul.f32 %v979, %v1107
    %v1124 = vmul.f32 %v980, %v1108
    %v1125 = vmul.f32 %v981, %v1109
    %v1126 = vmul.f32 %v982, %v1110
    %v1127 = vmul.f32 %v983, %v1111
    %v1128 = vmul.f32 %v984, %v1112
    %v1129 = vmul.f32 %v985, %v1113
    %v1130 = vmul.f32 %v986, %v1114
    %v1131 = vmul.f32 %v987, %v1115
    %1148 = vrot.lane.b32.xlu0 %v700, 5
    %v1149 = vpop.permute.xlu0 %1148
    %1150 = vrot.lane.b32.xlu0 %v701, 5
    %v1151 = vpop.permute.xlu0 %1150
    %1152 = vrot.lane.b32.xlu0 %v702, 5
    %v1153 = vpop.permute.xlu0 %1152
    %1154 = vrot.lane.b32.xlu0 %v703, 5
    %v1155 = vpop.permute.xlu0 %1154
    %1156 = vrot.lane.b32.xlu0 %v704, 5
    %v1157 = vpop.permute.xlu0 %1156
    %1158 = vrot.lane.b32.xlu0 %v705, 5
    %v1159 = vpop.permute.xlu0 %1158
    %1160 = vrot.lane.b32.xlu0 %v706, 5
    %v1161 = vpop.permute.xlu0 %1160
    %1162 = vrot.lane.b32.xlu0 %v707, 5
    %v1163 = vpop.permute.xlu0 %1162
    %1164 = vrot.lane.b32.xlu0 %v708, 5
    %v1165 = vpop.permute.xlu0 %1164
    %1166 = vrot.lane.b32.xlu0 %v709, 5
    %v1167 = vpop.permute.xlu0 %1166
    %1168 = vrot.lane.b32.xlu0 %v710, 5
    %v1169 = vpop.permute.xlu0 %1168
    %1170 = vrot.lane.b32.xlu0 %v711, 5
    %v1171 = vpop.permute.xlu0 %1170
    %1172 = vrot.lane.b32.xlu0 %v712, 5
    %v1173 = vpop.permute.xlu0 %1172
    %1174 = vrot.lane.b32.xlu0 %v713, 5
    %v1175 = vpop.permute.xlu0 %1174
    %1176 = vrot.lane.b32.xlu0 %v714, 5
    %v1177 = vpop.permute.xlu0 %1176
    %1178 = vrot.lane.b32.xlu0 %v715, 5
    %v1179 = vpop.permute.xlu0 %1178
    %vm1196 = vcmp.gt.f32.partialorder %v1116, %v1149
    %vm1197 = vcmp.gt.f32.partialorder %v1117, %v1151
    %vm1198 = vcmp.gt.f32.partialorder %v1118, %v1153
    %vm1199 = vcmp.gt.f32.partialorder %v1119, %v1155
    %vm1200 = vcmp.gt.f32.partialorder %v1120, %v1157
    %vm1201 = vcmp.gt.f32.partialorder %v1121, %v1159
    %vm1202 = vcmp.gt.f32.partialorder %v1122, %v1161
    %vm1203 = vcmp.gt.f32.partialorder %v1123, %v1163
    %vm1204 = vcmp.gt.f32.partialorder %v1124, %v1165
    %vm1205 = vcmp.gt.f32.partialorder %v1125, %v1167
    %vm1206 = vcmp.gt.f32.partialorder %v1126, %v1169
    %vm1207 = vcmp.gt.f32.partialorder %v1127, %v1171
    %vm1208 = vcmp.gt.f32.partialorder %v1128, %v1173
    %vm1209 = vcmp.gt.f32.partialorder %v1129, %v1175
    %vm1210 = vcmp.gt.f32.partialorder %v1130, %v1177
    %vm1211 = vcmp.gt.f32.partialorder %v1131, %v1179
    %v1212 = vsel %vm1196, 1, 0
    %v1213 = vsel %vm1197, 1, 0
    %v1214 = vsel %vm1198, 1, 0
    %v1215 = vsel %vm1199, 1, 0
    %v1216 = vsel %vm1200, 1, 0
    %v1217 = vsel %vm1201, 1, 0
    %v1218 = vsel %vm1202, 1, 0
    %v1219 = vsel %vm1203, 1, 0
    %v1220 = vsel %vm1204, 1, 0
    %v1221 = vsel %vm1205, 1, 0
    %v1222 = vsel %vm1206, 1, 0
    %v1223 = vsel %vm1207, 1, 0
    %v1224 = vsel %vm1208, 1, 0
    %v1225 = vsel %vm1209, 1, 0
    %v1226 = vsel %vm1210, 1, 0
    %v1227 = vsel %vm1211, 1, 0
    %v1228 = vcvt.s32.f32 %v1212
    %v1229 = vcvt.s32.f32 %v1213
    %v1230 = vcvt.s32.f32 %v1214
    %v1231 = vcvt.s32.f32 %v1215
    %v1232 = vcvt.s32.f32 %v1216
    %v1233 = vcvt.s32.f32 %v1217
    %v1234 = vcvt.s32.f32 %v1218
    %v1235 = vcvt.s32.f32 %v1219
    %v1236 = vcvt.s32.f32 %v1220
    %v1237 = vcvt.s32.f32 %v1221
    %v1238 = vcvt.s32.f32 %v1222
    %v1239 = vcvt.s32.f32 %v1223
    %v1240 = vcvt.s32.f32 %v1224
    %v1241 = vcvt.s32.f32 %v1225
    %v1242 = vcvt.s32.f32 %v1226
    %v1243 = vcvt.s32.f32 %v1227
    %v1244 = vsub.f32 1.0, %v1228
    %v1245 = vsub.f32 1.0, %v1229
    %v1246 = vsub.f32 1.0, %v1230
    %v1247 = vsub.f32 1.0, %v1231
    %v1248 = vsub.f32 1.0, %v1232
    %v1249 = vsub.f32 1.0, %v1233
    %v1250 = vsub.f32 1.0, %v1234
    %v1251 = vsub.f32 1.0, %v1235
    %v1252 = vsub.f32 1.0, %v1236
    %v1253 = vsub.f32 1.0, %v1237
    %v1254 = vsub.f32 1.0, %v1238
    %v1255 = vsub.f32 1.0, %v1239
    %v1256 = vsub.f32 1.0, %v1240
    %v1257 = vsub.f32 1.0, %v1241
    %v1258 = vsub.f32 1.0, %v1242
    %v1259 = vsub.f32 1.0, %v1243
    %v1260 = vsub.f32 1.0, %v28
    %v1261 = vsub.f32 1.0, %v29
    %v1262 = vsub.f32 1.0, %v30
    %v1263 = vsub.f32 1.0, %v31
    %v1264 = vsub.f32 1.0, %v32
    %v1265 = vsub.f32 1.0, %v33
    %v1266 = vsub.f32 1.0, %v34
    %v1267 = vsub.f32 1.0, %v35
    %v1268 = vsub.f32 1.0, %v36
    %v1269 = vsub.f32 1.0, %v37
    %v1270 = vsub.f32 1.0, %v38
    %v1271 = vsub.f32 1.0, %v39
    %v1272 = vsub.f32 1.0, %v40
    %v1273 = vsub.f32 1.0, %v41
    %v1274 = vsub.f32 1.0, %v42
    %v1275 = vsub.f32 1.0, %v43
    %1277 = vset.pattern.permute.xlu0 26
    %1278 = vperm.xlu0 %1277, %v1228
    %v1279 = vpop.permute.xlu0 %1278
    %1282 = vset.pattern.permute.xlu0 26
    %1283 = vperm.xlu0 %1282, %v1229
    %v1284 = vpop.permute.xlu0 %1283
    %1287 = vset.pattern.permute.xlu0 26
    %1288 = vperm.xlu0 %1287, %v1230
    %v1289 = vpop.permute.xlu0 %1288
    %1292 = vset.pattern.permute.xlu0 26
    %1293 = vperm.xlu0 %1292, %v1231
    %v1294 = vpop.permute.xlu0 %1293
    %1297 = vset.pattern.permute.xlu0 26
    %1298 = vperm.xlu0 %1297, %v1232
    %v1299 = vpop.permute.xlu0 %1298
    %1302 = vset.pattern.permute.xlu0 26
    %1303 = vperm.xlu0 %1302, %v1233
    %v1304 = vpop.permute.xlu0 %1303
    %1307 = vset.pattern.permute.xlu0 26
    %1308 = vperm.xlu0 %1307, %v1234
    %v1309 = vpop.permute.xlu0 %1308
    %1312 = vset.pattern.permute.xlu0 26
    %1313 = vperm.xlu0 %1312, %v1235
    %v1314 = vpop.permute.xlu0 %1313
    %1317 = vset.pattern.permute.xlu0 26
    %1318 = vperm.xlu0 %1317, %v1236
    %v1319 = vpop.permute.xlu0 %1318
    %1322 = vset.pattern.permute.xlu0 26
    %1323 = vperm.xlu0 %1322, %v1237
    %v1324 = vpop.permute.xlu0 %1323
    %1327 = vset.pattern.permute.xlu0 26
    %1328 = vperm.xlu0 %1327, %v1238
    %v1329 = vpop.permute.xlu0 %1328
    %1332 = vset.pattern.permute.xlu0 26
    %1333 = vperm.xlu0 %1332, %v1239
    %v1334 = vpop.permute.xlu0 %1333
    %1337 = vset.pattern.permute.xlu0 26
    %1338 = vperm.xlu0 %1337, %v1240
    %v1339 = vpop.permute.xlu0 %1338
    %1342 = vset.pattern.permute.xlu0 26
    %1343 = vperm.xlu0 %1342, %v1241
    %v1344 = vpop.permute.xlu0 %1343
    %1347 = vset.pattern.permute.xlu0 26
    %1348 = vperm.xlu0 %1347, %v1242
    %v1349 = vpop.permute.xlu0 %1348
    %1352 = vset.pattern.permute.xlu0 26
    %1353 = vperm.xlu0 %1352, %v1243
    %v1354 = vpop.permute.xlu0 %1353
    %v1356 = vmul.f32 %v1279, %v12
    %v1357 = vmul.f32 %v1284, %v13
    %v1358 = vmul.f32 %v1289, %v14
    %v1359 = vmul.f32 %v1294, %v15
    %v1360 = vmul.f32 %v1299, %v16
    %v1361 = vmul.f32 %v1304, %v17
    %v1362 = vmul.f32 %v1309, %v18
    %v1363 = vmul.f32 %v1314, %v19
    %v1364 = vmul.f32 %v1319, %v20
    %v1365 = vmul.f32 %v1324, %v21
    %v1366 = vmul.f32 %v1329, %v22
    %v1367 = vmul.f32 %v1334, %v23
    %v1368 = vmul.f32 %v1339, %v24
    %v1369 = vmul.f32 %v1344, %v25
    %v1370 = vmul.f32 %v1349, %v26
    %v1371 = vmul.f32 %v1354, %v27
    %1373 = vset.pattern.permute.xlu0 26
    %1374 = vperm.xlu0 %1373, %v1244
    %v1375 = vpop.permute.xlu0 %1374
    %1378 = vset.pattern.permute.xlu0 26
    %1379 = vperm.xlu0 %1378, %v1245
    %v1380 = vpop.permute.xlu0 %1379
    %1383 = vset.pattern.permute.xlu0 26
    %1384 = vperm.xlu0 %1383, %v1246
    %v1385 = vpop.permute.xlu0 %1384
    %1388 = vset.pattern.permute.xlu0 26
    %1389 = vperm.xlu0 %1388, %v1247
    %v1390 = vpop.permute.xlu0 %1389
    %1393 = vset.pattern.permute.xlu0 26
    %1394 = vperm.xlu0 %1393, %v1248
    %v1395 = vpop.permute.xlu0 %1394
    %1398 = vset.pattern.permute.xlu0 26
    %1399 = vperm.xlu0 %1398, %v1249
    %v1400 = vpop.permute.xlu0 %1399
    %1403 = vset.pattern.permute.xlu0 26
    %1404 = vperm.xlu0 %1403, %v1250
    %v1405 = vpop.permute.xlu0 %1404
    %1408 = vset.pattern.permute.xlu0 26
    %1409 = vperm.xlu0 %1408, %v1251
    %v1410 = vpop.permute.xlu0 %1409
    %1413 = vset.pattern.permute.xlu0 26
    %1414 = vperm.xlu0 %1413, %v1252
    %v1415 = vpop.permute.xlu0 %1414
    %1418 = vset.pattern.permute.xlu0 26
    %1419 = vperm.xlu0 %1418, %v1253
    %v1420 = vpop.permute.xlu0 %1419
    %1423 = vset.pattern.permute.xlu0 26
    %1424 = vperm.xlu0 %1423, %v1254
    %v1425 = vpop.permute.xlu0 %1424
    %1428 = vset.pattern.permute.xlu0 26
    %1429 = vperm.xlu0 %1428, %v1255
    %v1430 = vpop.permute.xlu0 %1429
    %1433 = vset.pattern.permute.xlu0 26
    %1434 = vperm.xlu0 %1433, %v1256
    %v1435 = vpop.permute.xlu0 %1434
    %1438 = vset.pattern.permute.xlu0 26
    %1439 = vperm.xlu0 %1438, %v1257
    %v1440 = vpop.permute.xlu0 %1439
    %1443 = vset.pattern.permute.xlu0 26
    %1444 = vperm.xlu0 %1443, %v1258
    %v1445 = vpop.permute.xlu0 %1444
    %1448 = vset.pattern.permute.xlu0 26
    %1449 = vperm.xlu0 %1448, %v1259
    %v1450 = vpop.permute.xlu0 %1449
    %v1452 = vmul.f32 %v1375, %v12
    %v1453 = vmul.f32 %v1380, %v13
    %v1454 = vmul.f32 %v1385, %v14
    %v1455 = vmul.f32 %v1390, %v15
    %v1456 = vmul.f32 %v1395, %v16
    %v1457 = vmul.f32 %v1400, %v17
    %v1458 = vmul.f32 %v1405, %v18
    %v1459 = vmul.f32 %v1410, %v19
    %v1460 = vmul.f32 %v1415, %v20
    %v1461 = vmul.f32 %v1420, %v21
    %v1462 = vmul.f32 %v1425, %v22
    %v1463 = vmul.f32 %v1430, %v23
    %v1464 = vmul.f32 %v1435, %v24
    %v1465 = vmul.f32 %v1440, %v25
    %v1466 = vmul.f32 %v1445, %v26
    %v1467 = vmul.f32 %v1450, %v27
    %1484 = vrot.lane.b32.xlu0 %v1452, 5
    %v1485 = vpop.permute.xlu0 %1484
    %1486 = vrot.lane.b32.xlu0 %v1453, 5
    %v1487 = vpop.permute.xlu0 %1486
    %1488 = vrot.lane.b32.xlu0 %v1454, 5
    %v1489 = vpop.permute.xlu0 %1488
    %1490 = vrot.lane.b32.xlu0 %v1455, 5
    %v1491 = vpop.permute.xlu0 %1490
    %1492 = vrot.lane.b32.xlu0 %v1456, 5
    %v1493 = vpop.permute.xlu0 %1492
    %1494 = vrot.lane.b32.xlu0 %v1457, 5
    %v1495 = vpop.permute.xlu0 %1494
    %1496 = vrot.lane.b32.xlu0 %v1458, 5
    %v1497 = vpop.permute.xlu0 %1496
    %1498 = vrot.lane.b32.xlu0 %v1459, 5
    %v1499 = vpop.permute.xlu0 %1498
    %1500 = vrot.lane.b32.xlu0 %v1460, 5
    %v1501 = vpop.permute.xlu0 %1500
    %1502 = vrot.lane.b32.xlu0 %v1461, 5
    %v1503 = vpop.permute.xlu0 %1502
    %1504 = vrot.lane.b32.xlu0 %v1462, 5
    %v1505 = vpop.permute.xlu0 %1504
    %1506 = vrot.lane.b32.xlu0 %v1463, 5
    %v1507 = vpop.permute.xlu0 %1506
    %1508 = vrot.lane.b32.xlu0 %v1464, 5
    %v1509 = vpop.permute.xlu0 %1508
    %1510 = vrot.lane.b32.xlu0 %v1465, 5
    %v1511 = vpop.permute.xlu0 %1510
    %1512 = vrot.lane.b32.xlu0 %v1466, 5
    %v1513 = vpop.permute.xlu0 %1512
    %1514 = vrot.lane.b32.xlu0 %v1467, 5
    %v1515 = vpop.permute.xlu0 %1514
    %v1532 = vadd.f32 %v1356, %v1485
    %v1533 = vadd.f32 %v1357, %v1487
    %v1534 = vadd.f32 %v1358, %v1489
    %v1535 = vadd.f32 %v1359, %v1491
    %v1536 = vadd.f32 %v1360, %v1493
    %v1537 = vadd.f32 %v1361, %v1495
    %v1538 = vadd.f32 %v1362, %v1497
    %v1539 = vadd.f32 %v1363, %v1499
    %v1540 = vadd.f32 %v1364, %v1501
    %v1541 = vadd.f32 %v1365, %v1503
    %v1542 = vadd.f32 %v1366, %v1505
    %v1543 = vadd.f32 %v1367, %v1507
    %v1544 = vadd.f32 %v1368, %v1509
    %v1545 = vadd.f32 %v1369, %v1511
    %v1546 = vadd.f32 %v1370, %v1513
    %v1547 = vadd.f32 %v1371, %v1515
    %1549 = vset.pattern.permute.xlu0 20
    %1550 = vperm.xlu0 %1549, %v28
    %v1551 = vpop.permute.xlu0 %1550
    %1554 = vset.pattern.permute.xlu0 20
    %1555 = vperm.xlu0 %1554, %v29
    %v1556 = vpop.permute.xlu0 %1555
    %1559 = vset.pattern.permute.xlu0 20
    %1560 = vperm.xlu0 %1559, %v30
    %v1561 = vpop.permute.xlu0 %1560
    %1564 = vset.pattern.permute.xlu0 20
    %1565 = vperm.xlu0 %1564, %v31
    %v1566 = vpop.permute.xlu0 %1565
    %1569 = vset.pattern.permute.xlu0 20
    %1570 = vperm.xlu0 %1569, %v32
    %v1571 = vpop.permute.xlu0 %1570
    %1574 = vset.pattern.permute.xlu0 20
    %1575 = vperm.xlu0 %1574, %v33
    %v1576 = vpop.permute.xlu0 %1575
    %1579 = vset.pattern.permute.xlu0 20
    %1580 = vperm.xlu0 %1579, %v34
    %v1581 = vpop.permute.xlu0 %1580
    %1584 = vset.pattern.permute.xlu0 20
    %1585 = vperm.xlu0 %1584, %v35
    %v1586 = vpop.permute.xlu0 %1585
    %1589 = vset.pattern.permute.xlu0 20
    %1590 = vperm.xlu0 %1589, %v36
    %v1591 = vpop.permute.xlu0 %1590
    %1594 = vset.pattern.permute.xlu0 20
    %1595 = vperm.xlu0 %1594, %v37
    %v1596 = vpop.permute.xlu0 %1595
    %1599 = vset.pattern.permute.xlu0 20
    %1600 = vperm.xlu0 %1599, %v38
    %v1601 = vpop.permute.xlu0 %1600
    %1604 = vset.pattern.permute.xlu0 20
    %1605 = vperm.xlu0 %1604, %v39
    %v1606 = vpop.permute.xlu0 %1605
    %1609 = vset.pattern.permute.xlu0 20
    %1610 = vperm.xlu0 %1609, %v40
    %v1611 = vpop.permute.xlu0 %1610
    %1614 = vset.pattern.permute.xlu0 20
    %1615 = vperm.xlu0 %1614, %v41
    %v1616 = vpop.permute.xlu0 %1615
    %1619 = vset.pattern.permute.xlu0 20
    %1620 = vperm.xlu0 %1619, %v42
    %v1621 = vpop.permute.xlu0 %1620
    %1624 = vset.pattern.permute.xlu0 20
    %1625 = vperm.xlu0 %1624, %v43
    %v1626 = vpop.permute.xlu0 %1625
    %v1628 = vmul.f32 %v1551, %v1532
    %v1629 = vmul.f32 %v1556, %v1533
    %v1630 = vmul.f32 %v1561, %v1534
    %v1631 = vmul.f32 %v1566, %v1535
    %v1632 = vmul.f32 %v1571, %v1536
    %v1633 = vmul.f32 %v1576, %v1537
    %v1634 = vmul.f32 %v1581, %v1538
    %v1635 = vmul.f32 %v1586, %v1539
    %v1636 = vmul.f32 %v1591, %v1540
    %v1637 = vmul.f32 %v1596, %v1541
    %v1638 = vmul.f32 %v1601, %v1542
    %v1639 = vmul.f32 %v1606, %v1543
    %v1640 = vmul.f32 %v1611, %v1544
    %v1641 = vmul.f32 %v1616, %v1545
    %v1642 = vmul.f32 %v1621, %v1546
    %v1643 = vmul.f32 %v1626, %v1547
    %v1644 = vmul.f32 %v1551, %v28
    %v1645 = vmul.f32 %v1556, %v29
    %v1646 = vmul.f32 %v1561, %v30
    %v1647 = vmul.f32 %v1566, %v31
    %v1648 = vmul.f32 %v1571, %v32
    %v1649 = vmul.f32 %v1576, %v33
    %v1650 = vmul.f32 %v1581, %v34
    %v1651 = vmul.f32 %v1586, %v35
    %v1652 = vmul.f32 %v1591, %v36
    %v1653 = vmul.f32 %v1596, %v37
    %v1654 = vmul.f32 %v1601, %v38
    %v1655 = vmul.f32 %v1606, %v39
    %v1656 = vmul.f32 %v1611, %v40
    %v1657 = vmul.f32 %v1616, %v41
    %v1658 = vmul.f32 %v1621, %v42
    %v1659 = vmul.f32 %v1626, %v43
    %1676 = vrot.lane.b32.xlu0 %v1644, 5
    %v1677 = vpop.permute.xlu0 %1676
    %1678 = vrot.lane.b32.xlu0 %v1645, 5
    %v1679 = vpop.permute.xlu0 %1678
    %1680 = vrot.lane.b32.xlu0 %v1646, 5
    %v1681 = vpop.permute.xlu0 %1680
    %1682 = vrot.lane.b32.xlu0 %v1647, 5
    %v1683 = vpop.permute.xlu0 %1682
    %1684 = vrot.lane.b32.xlu0 %v1648, 5
    %v1685 = vpop.permute.xlu0 %1684
    %1686 = vrot.lane.b32.xlu0 %v1649, 5
    %v1687 = vpop.permute.xlu0 %1686
    %1688 = vrot.lane.b32.xlu0 %v1650, 5
    %v1689 = vpop.permute.xlu0 %1688
    %1690 = vrot.lane.b32.xlu0 %v1651, 5
    %v1691 = vpop.permute.xlu0 %1690
    %1692 = vrot.lane.b32.xlu0 %v1652, 5
    %v1693 = vpop.permute.xlu0 %1692
    %1694 = vrot.lane.b32.xlu0 %v1653, 5
    %v1695 = vpop.permute.xlu0 %1694
    %1696 = vrot.lane.b32.xlu0 %v1654, 5
    %v1697 = vpop.permute.xlu0 %1696
    %1698 = vrot.lane.b32.xlu0 %v1655, 5
    %v1699 = vpop.permute.xlu0 %1698
    %1700 = vrot.lane.b32.xlu0 %v1656, 5
    %v1701 = vpop.permute.xlu0 %1700
    %1702 = vrot.lane.b32.xlu0 %v1657, 5
    %v1703 = vpop.permute.xlu0 %1702
    %1704 = vrot.lane.b32.xlu0 %v1658, 5
    %v1705 = vpop.permute.xlu0 %1704
    %1706 = vrot.lane.b32.xlu0 %v1659, 5
    %v1707 = vpop.permute.xlu0 %1706
    %v1724 = vsub.f32 %v1628, %v1677
    %v1725 = vsub.f32 %v1629, %v1679
    %v1726 = vsub.f32 %v1630, %v1681
    %v1727 = vsub.f32 %v1631, %v1683
    %v1728 = vsub.f32 %v1632, %v1685
    %v1729 = vsub.f32 %v1633, %v1687
    %v1730 = vsub.f32 %v1634, %v1689
    %v1731 = vsub.f32 %v1635, %v1691
    %v1732 = vsub.f32 %v1636, %v1693
    %v1733 = vsub.f32 %v1637, %v1695
    %v1734 = vsub.f32 %v1638, %v1697
    %v1735 = vsub.f32 %v1639, %v1699
    %v1736 = vsub.f32 %v1640, %v1701
    %v1737 = vsub.f32 %v1641, %v1703
    %v1738 = vsub.f32 %v1642, %v1705
    %v1739 = vsub.f32 %v1643, %v1707
    %v1740 = vrsqrt.pop %v1628
    %v1741 = vmul.f32 %v1628, %v1740
    %vm1742 = vcmp.eq.f32.partialorder %v1628, inf
    %v1743 = vsel %vm1742, %v1628, %v1741
    %vm1744 = vcmp.eq.f32.partialorder %v1628, 0.0
    %v1745 = vand.u32 %v1628, 2147483648
    %v1746 = vsel %vm1744, %v1745, %v1743
    %v1747 = vrsqrt.pop %v1629
    %v1748 = vmul.f32 %v1629, %v1747
    %vm1749 = vcmp.eq.f32.partialorder %v1629, inf
    %v1750 = vsel %vm1749, %v1629, %v1748
    %vm1751 = vcmp.eq.f32.partialorder %v1629, 0.0
    %v1752 = vand.u32 %v1629, 2147483648
    %v1753 = vsel %vm1751, %v1752, %v1750
    %v1754 = vrsqrt.pop %v1630
    %v1755 = vmul.f32 %v1630, %v1754
    %vm1756 = vcmp.eq.f32.partialorder %v1630, inf
    %v1757 = vsel %vm1756, %v1630, %v1755
    %vm1758 = vcmp.eq.f32.partialorder %v1630, 0.0
    %v1759 = vand.u32 %v1630, 2147483648
    %v1760 = vsel %vm1758, %v1759, %v1757
    %v1761 = vrsqrt.pop %v1631
    %v1762 = vmul.f32 %v1631, %v1761
    %vm1763 = vcmp.eq.f32.partialorder %v1631, inf
    %v1764 = vsel %vm1763, %v1631, %v1762
    %vm1765 = vcmp.eq.f32.partialorder %v1631, 0.0
    %v1766 = vand.u32 %v1631, 2147483648
    %v1767 = vsel %vm1765, %v1766, %v1764
    %v1768 = vrsqrt.pop %v1632
    %v1769 = vmul.f32 %v1632, %v1768
    %vm1770 = vcmp.eq.f32.partialorder %v1632, inf
    %v1771 = vsel %vm1770, %v1632, %v1769
    %vm1772 = vcmp.eq.f32.partialorder %v1632, 0.0
    %v1773 = vand.u32 %v1632, 2147483648
    %v1774 = vsel %vm1772, %v1773, %v1771
    %v1775 = vrsqrt.pop %v1633
    %v1776 = vmul.f32 %v1633, %v1775
    %vm1777 = vcmp.eq.f32.partialorder %v1633, inf
    %v1778 = vsel %vm1777, %v1633, %v1776
    %vm1779 = vcmp.eq.f32.partialorder %v1633, 0.0
    %v1780 = vand.u32 %v1633, 2147483648
    %v1781 = vsel %vm1779, %v1780, %v1778
    %v1782 = vrsqrt.pop %v1634
    %v1783 = vmul.f32 %v1634, %v1782
    %vm1784 = vcmp.eq.f32.partialorder %v1634, inf
    %v1785 = vsel %vm1784, %v1634, %v1783
    %vm1786 = vcmp.eq.f32.partialorder %v1634, 0.0
    %v1787 = vand.u32 %v1634, 2147483648
    %v1788 = vsel %vm1786, %v1787, %v1785
    %v1789 = vrsqrt.pop %v1635
    %v1790 = vmul.f32 %v1635, %v1789
    %vm1791 = vcmp.eq.f32.partialorder %v1635, inf
    %v1792 = vsel %vm1791, %v1635, %v1790
    %vm1793 = vcmp.eq.f32.partialorder %v1635, 0.0
    %v1794 = vand.u32 %v1635, 2147483648
    %v1795 = vsel %vm1793, %v1794, %v1792
    %v1796 = vrsqrt.pop %v1636
    %v1797 = vmul.f32 %v1636, %v1796
    %vm1798 = vcmp.eq.f32.partialorder %v1636, inf
    %v1799 = vsel %vm1798, %v1636, %v1797
    %vm1800 = vcmp.eq.f32.partialorder %v1636, 0.0
    %v1801 = vand.u32 %v1636, 2147483648
    %v1802 = vsel %vm1800, %v1801, %v1799
    %v1803 = vrsqrt.pop %v1637
    %v1804 = vmul.f32 %v1637, %v1803
    %vm1805 = vcmp.eq.f32.partialorder %v1637, inf
    %v1806 = vsel %vm1805, %v1637, %v1804
    %vm1807 = vcmp.eq.f32.partialorder %v1637, 0.0
    %v1808 = vand.u32 %v1637, 2147483648
    %v1809 = vsel %vm1807, %v1808, %v1806
    %v1810 = vrsqrt.pop %v1638
    %v1811 = vmul.f32 %v1638, %v1810
    %vm1812 = vcmp.eq.f32.partialorder %v1638, inf
    %v1813 = vsel %vm1812, %v1638, %v1811
    %vm1814 = vcmp.eq.f32.partialorder %v1638, 0.0
    %v1815 = vand.u32 %v1638, 2147483648
    %v1816 = vsel %vm1814, %v1815, %v1813
    %v1817 = vrsqrt.pop %v1639
    %v1818 = vmul.f32 %v1639, %v1817
    %vm1819 = vcmp.eq.f32.partialorder %v1639, inf
    %v1820 = vsel %vm1819, %v1639, %v1818
    %vm1821 = vcmp.eq.f32.partialorder %v1639, 0.0
    %v1822 = vand.u32 %v1639, 2147483648
    %v1823 = vsel %vm1821, %v1822, %v1820
    %v1824 = vrsqrt.pop %v1640
    %v1825 = vmul.f32 %v1640, %v1824
    %vm1826 = vcmp.eq.f32.partialorder %v1640, inf
    %v1827 = vsel %vm1826, %v1640, %v1825
    %vm1828 = vcmp.eq.f32.partialorder %v1640, 0.0
    %v1829 = vand.u32 %v1640, 2147483648
    %v1830 = vsel %vm1828, %v1829, %v1827
    %v1831 = vrsqrt.pop %v1641
    %v1832 = vmul.f32 %v1641, %v1831
    %vm1833 = vcmp.eq.f32.partialorder %v1641, inf
    %v1834 = vsel %vm1833, %v1641, %v1832
    %vm1835 = vcmp.eq.f32.partialorder %v1641, 0.0
    %v1836 = vand.u32 %v1641, 2147483648
    %v1837 = vsel %vm1835, %v1836, %v1834
    %v1838 = vrsqrt.pop %v1642
    %v1839 = vmul.f32 %v1642, %v1838
    %vm1840 = vcmp.eq.f32.partialorder %v1642, inf
    %v1841 = vsel %vm1840, %v1642, %v1839
    %vm1842 = vcmp.eq.f32.partialorder %v1642, 0.0
    %v1843 = vand.u32 %v1642, 2147483648
    %v1844 = vsel %vm1842, %v1843, %v1841
    %v1845 = vrsqrt.pop %v1643
    %v1846 = vmul.f32 %v1643, %v1845
    %vm1847 = vcmp.eq.f32.partialorder %v1643, inf
    %v1848 = vsel %vm1847, %v1643, %v1846
    %vm1849 = vcmp.eq.f32.partialorder %v1643, 0.0
    %v1850 = vand.u32 %v1643, 2147483648
    %v1851 = vsel %vm1849, %v1850, %v1848
    %v1852 = vrsqrt.pop %v1644
    %v1853 = vmul.f32 %v1644, %v1852
    %vm1854 = vcmp.eq.f32.partialorder %v1644, inf
    %v1855 = vsel %vm1854, %v1644, %v1853
    %vm1856 = vcmp.eq.f32.partialorder %v1644, 0.0
    %v1857 = vand.u32 %v1644, 2147483648
    %v1858 = vsel %vm1856, %v1857, %v1855
    %v1859 = vrsqrt.pop %v1645
    %v1860 = vmul.f32 %v1645, %v1859
    %vm1861 = vcmp.eq.f32.partialorder %v1645, inf
    %v1862 = vsel %vm1861, %v1645, %v1860
    %vm1863 = vcmp.eq.f32.partialorder %v1645, 0.0
    %v1864 = vand.u32 %v1645, 2147483648
    %v1865 = vsel %vm1863, %v1864, %v1862
    %v1866 = vrsqrt.pop %v1646
    %v1867 = vmul.f32 %v1646, %v1866
    %vm1868 = vcmp.eq.f32.partialorder %v1646, inf
    %v1869 = vsel %vm1868, %v1646, %v1867
    %vm1870 = vcmp.eq.f32.partialorder %v1646, 0.0
    %v1871 = vand.u32 %v1646, 2147483648
    %v1872 = vsel %vm1870, %v1871, %v1869
    %v1873 = vrsqrt.pop %v1647
    %v1874 = vmul.f32 %v1647, %v1873
    %vm1875 = vcmp.eq.f32.partialorder %v1647, inf
    %v1876 = vsel %vm1875, %v1647, %v1874
    %vm1877 = vcmp.eq.f32.partialorder %v1647, 0.0
    %v1878 = vand.u32 %v1647, 2147483648
    %v1879 = vsel %vm1877, %v1878, %v1876
    %v1880 = vrsqrt.pop %v1648
    %v1881 = vmul.f32 %v1648, %v1880
    %vm1882 = vcmp.eq.f32.partialorder %v1648, inf
    %v1883 = vsel %vm1882, %v1648, %v1881
    %vm1884 = vcmp.eq.f32.partialorder %v1648, 0.0
    %v1885 = vand.u32 %v1648, 2147483648
    %v1886 = vsel %vm1884, %v1885, %v1883
    %v1887 = vrsqrt.pop %v1649
    %v1888 = vmul.f32 %v1649, %v1887
    %vm1889 = vcmp.eq.f32.partialorder %v1649, inf
    %v1890 = vsel %vm1889, %v1649, %v1888
    %vm1891 = vcmp.eq.f32.partialorder %v1649, 0.0
    %v1892 = vand.u32 %v1649, 2147483648
    %v1893 = vsel %vm1891, %v1892, %v1890
    %v1894 = vrsqrt.pop %v1650
    %v1895 = vmul.f32 %v1650, %v1894
    %vm1896 = vcmp.eq.f32.partialorder %v1650, inf
    %v1897 = vsel %vm1896, %v1650, %v1895
    %vm1898 = vcmp.eq.f32.partialorder %v1650, 0.0
    %v1899 = vand.u32 %v1650, 2147483648
    %v1900 = vsel %vm1898, %v1899, %v1897
    %v1901 = vrsqrt.pop %v1651
    %v1902 = vmul.f32 %v1651, %v1901
    %vm1903 = vcmp.eq.f32.partialorder %v1651, inf
    %v1904 = vsel %vm1903, %v1651, %v1902
    %vm1905 = vcmp.eq.f32.partialorder %v1651, 0.0
    %v1906 = vand.u32 %v1651, 2147483648
    %v1907 = vsel %vm1905, %v1906, %v1904
    %v1908 = vrsqrt.pop %v1652
    %v1909 = vmul.f32 %v1652, %v1908
    %vm1910 = vcmp.eq.f32.partialorder %v1652, inf
    %v1911 = vsel %vm1910, %v1652, %v1909
    %vm1912 = vcmp.eq.f32.partialorder %v1652, 0.0
    %v1913 = vand.u32 %v1652, 2147483648
    %v1914 = vsel %vm1912, %v1913, %v1911
    %v1915 = vrsqrt.pop %v1653
    %v1916 = vmul.f32 %v1653, %v1915
    %vm1917 = vcmp.eq.f32.partialorder %v1653, inf
    %v1918 = vsel %vm1917, %v1653, %v1916
    %vm1919 = vcmp.eq.f32.partialorder %v1653, 0.0
    %v1920 = vand.u32 %v1653, 2147483648
    %v1921 = vsel %vm1919, %v1920, %v1918
    %v1922 = vrsqrt.pop %v1654
    %v1923 = vmul.f32 %v1654, %v1922
    %vm1924 = vcmp.eq.f32.partialorder %v1654, inf
    %v1925 = vsel %vm1924, %v1654, %v1923
    %vm1926 = vcmp.eq.f32.partialorder %v1654, 0.0
    %v1927 = vand.u32 %v1654, 2147483648
    %v1928 = vsel %vm1926, %v1927, %v1925
    %v1929 = vrsqrt.pop %v1655
    %v1930 = vmul.f32 %v1655, %v1929
    %vm1931 = vcmp.eq.f32.partialorder %v1655, inf
    %v1932 = vsel %vm1931, %v1655, %v1930
    %vm1933 = vcmp.eq.f32.partialorder %v1655, 0.0
    %v1934 = vand.u32 %v1655, 2147483648
    %v1935 = vsel %vm1933, %v1934, %v1932
    %v1936 = vrsqrt.pop %v1656
    %v1937 = vmul.f32 %v1656, %v1936
    %vm1938 = vcmp.eq.f32.partialorder %v1656, inf
    %v1939 = vsel %vm1938, %v1656, %v1937
    %vm1940 = vcmp.eq.f32.partialorder %v1656, 0.0
    %v1941 = vand.u32 %v1656, 2147483648
    %v1942 = vsel %vm1940, %v1941, %v1939
    %v1943 = vrsqrt.pop %v1657
    %v1944 = vmul.f32 %v1657, %v1943
    %vm1945 = vcmp.eq.f32.partialorder %v1657, inf
    %v1946 = vsel %vm1945, %v1657, %v1944
    %vm1947 = vcmp.eq.f32.partialorder %v1657, 0.0
    %v1948 = vand.u32 %v1657, 2147483648
    %v1949 = vsel %vm1947, %v1948, %v1946
    %v1950 = vrsqrt.pop %v1658
    %v1951 = vmul.f32 %v1658, %v1950
    %vm1952 = vcmp.eq.f32.partialorder %v1658, inf
    %v1953 = vsel %vm1952, %v1658, %v1951
    %vm1954 = vcmp.eq.f32.partialorder %v1658, 0.0
    %v1955 = vand.u32 %v1658, 2147483648
    %v1956 = vsel %vm1954, %v1955, %v1953
    %v1957 = vrsqrt.pop %v1659
    %v1958 = vmul.f32 %v1659, %v1957
    %vm1959 = vcmp.eq.f32.partialorder %v1659, inf
    %v1960 = vsel %vm1959, %v1659, %v1958
    %vm1961 = vcmp.eq.f32.partialorder %v1659, 0.0
    %v1962 = vand.u32 %v1659, 2147483648
    %v1963 = vsel %vm1961, %v1962, %v1960
    %1980 = vrot.lane.b32.xlu0 %v1858, 5
    %v1981 = vpop.permute.xlu0 %1980
    %1982 = vrot.lane.b32.xlu0 %v1865, 5
    %v1983 = vpop.permute.xlu0 %1982
    %1984 = vrot.lane.b32.xlu0 %v1872, 5
    %v1985 = vpop.permute.xlu0 %1984
    %1986 = vrot.lane.b32.xlu0 %v1879, 5
    %v1987 = vpop.permute.xlu0 %1986
    %1988 = vrot.lane.b32.xlu0 %v1886, 5
    %v1989 = vpop.permute.xlu0 %1988
    %1990 = vrot.lane.b32.xlu0 %v1893, 5
    %v1991 = vpop.permute.xlu0 %1990
    %1992 = vrot.lane.b32.xlu0 %v1900, 5
    %v1993 = vpop.permute.xlu0 %1992
    %1994 = vrot.lane.b32.xlu0 %v1907, 5
    %v1995 = vpop.permute.xlu0 %1994
    %1996 = vrot.lane.b32.xlu0 %v1914, 5
    %v1997 = vpop.permute.xlu0 %1996
    %1998 = vrot.lane.b32.xlu0 %v1921, 5
    %v1999 = vpop.permute.xlu0 %1998
    %2000 = vrot.lane.b32.xlu0 %v1928, 5
    %v2001 = vpop.permute.xlu0 %2000
    %2002 = vrot.lane.b32.xlu0 %v1935, 5
    %v2003 = vpop.permute.xlu0 %2002
    %2004 = vrot.lane.b32.xlu0 %v1942, 5
    %v2005 = vpop.permute.xlu0 %2004
    %2006 = vrot.lane.b32.xlu0 %v1949, 5
    %v2007 = vpop.permute.xlu0 %2006
    %2008 = vrot.lane.b32.xlu0 %v1956, 5
    %v2009 = vpop.permute.xlu0 %2008
    %2010 = vrot.lane.b32.xlu0 %v1963, 5
    %v2011 = vpop.permute.xlu0 %2010
    %v2028 = vsub.f32 %v1746, %v1981
    %v2029 = vsub.f32 %v1753, %v1983
    %v2030 = vsub.f32 %v1760, %v1985
    %v2031 = vsub.f32 %v1767, %v1987
    %v2032 = vsub.f32 %v1774, %v1989
    %v2033 = vsub.f32 %v1781, %v1991
    %v2034 = vsub.f32 %v1788, %v1993
    %v2035 = vsub.f32 %v1795, %v1995
    %v2036 = vsub.f32 %v1802, %v1997
    %v2037 = vsub.f32 %v1809, %v1999
    %v2038 = vsub.f32 %v1816, %v2001
    %v2039 = vsub.f32 %v1823, %v2003
    %v2040 = vsub.f32 %v1830, %v2005
    %v2041 = vsub.f32 %v1837, %v2007
    %v2042 = vsub.f32 %v1844, %v2009
    %v2043 = vsub.f32 %v1851, %v2011
    %v2044 = vmul.f32 %v1724, %v1724
    %v2045 = vmul.f32 %v1725, %v1725
    %v2046 = vmul.f32 %v1726, %v1726
    %v2047 = vmul.f32 %v1727, %v1727
    %v2048 = vmul.f32 %v1728, %v1728
    %v2049 = vmul.f32 %v1729, %v1729
    %v2050 = vmul.f32 %v1730, %v1730
    %v2051 = vmul.f32 %v1731, %v1731
    %v2052 = vmul.f32 %v1732, %v1732
    %v2053 = vmul.f32 %v1733, %v1733
    %v2054 = vmul.f32 %v1734, %v1734
    %v2055 = vmul.f32 %v1735, %v1735
    %v2056 = vmul.f32 %v1736, %v1736
    %v2057 = vmul.f32 %v1737, %v1737
    %v2058 = vmul.f32 %v1738, %v1738
    %v2059 = vmul.f32 %v1739, %v1739
    %v2060 = vmul.f32 %v2028, %v2028
    %v2061 = vmul.f32 %v2029, %v2029
    %v2062 = vmul.f32 %v2030, %v2030
    %v2063 = vmul.f32 %v2031, %v2031
    %v2064 = vmul.f32 %v2032, %v2032
    %v2065 = vmul.f32 %v2033, %v2033
    %v2066 = vmul.f32 %v2034, %v2034
    %v2067 = vmul.f32 %v2035, %v2035
    %v2068 = vmul.f32 %v2036, %v2036
    %v2069 = vmul.f32 %v2037, %v2037
    %v2070 = vmul.f32 %v2038, %v2038
    %v2071 = vmul.f32 %v2039, %v2039
    %v2072 = vmul.f32 %v2040, %v2040
    %v2073 = vmul.f32 %v2041, %v2041
    %v2074 = vmul.f32 %v2042, %v2042
    %v2075 = vmul.f32 %v2043, %v2043
    %2092 = vrot.lane.b32.xlu0 %v2060, 126
    %v2093 = vpop.permute.xlu0 %2092
    %2094 = vrot.lane.b32.xlu0 %v2061, 126
    %v2095 = vpop.permute.xlu0 %2094
    %2096 = vrot.lane.b32.xlu0 %v2062, 126
    %v2097 = vpop.permute.xlu0 %2096
    %2098 = vrot.lane.b32.xlu0 %v2063, 126
    %v2099 = vpop.permute.xlu0 %2098
    %2100 = vrot.lane.b32.xlu0 %v2064, 126
    %v2101 = vpop.permute.xlu0 %2100
    %2102 = vrot.lane.b32.xlu0 %v2065, 126
    %v2103 = vpop.permute.xlu0 %2102
    %2104 = vrot.lane.b32.xlu0 %v2066, 126
    %v2105 = vpop.permute.xlu0 %2104
    %2106 = vrot.lane.b32.xlu0 %v2067, 126
    %v2107 = vpop.permute.xlu0 %2106
    %2108 = vrot.lane.b32.xlu0 %v2068, 126
    %v2109 = vpop.permute.xlu0 %2108
    %2110 = vrot.lane.b32.xlu0 %v2069, 126
    %v2111 = vpop.permute.xlu0 %2110
    %2112 = vrot.lane.b32.xlu0 %v2070, 126
    %v2113 = vpop.permute.xlu0 %2112
    %2114 = vrot.lane.b32.xlu0 %v2071, 126
    %v2115 = vpop.permute.xlu0 %2114
    %2116 = vrot.lane.b32.xlu0 %v2072, 126
    %v2117 = vpop.permute.xlu0 %2116
    %2118 = vrot.lane.b32.xlu0 %v2073, 126
    %v2119 = vpop.permute.xlu0 %2118
    %2120 = vrot.lane.b32.xlu0 %v2074, 126
    %v2121 = vpop.permute.xlu0 %2120
    %2122 = vrot.lane.b32.xlu0 %v2075, 126
    %v2123 = vpop.permute.xlu0 %2122
    %v2140 = vadd.f32 %v2044, %v2093
    %v2141 = vadd.f32 %v2045, %v2095
    %v2142 = vadd.f32 %v2046, %v2097
    %v2143 = vadd.f32 %v2047, %v2099
    %v2144 = vadd.f32 %v2048, %v2101
    %v2145 = vadd.f32 %v2049, %v2103
    %v2146 = vadd.f32 %v2050, %v2105
    %v2147 = vadd.f32 %v2051, %v2107
    %v2148 = vadd.f32 %v2052, %v2109
    %v2149 = vadd.f32 %v2053, %v2111
    %v2150 = vadd.f32 %v2054, %v2113
    %v2151 = vadd.f32 %v2055, %v2115
    %v2152 = vadd.f32 %v2056, %v2117
    %v2153 = vadd.f32 %v2057, %v2119
    %v2154 = vadd.f32 %v2058, %v2121
    %v2155 = vadd.f32 %v2059, %v2123
    %2172 = vrot.lane.b32.xlu0 %v12, 1
    %v2173 = vpop.permute.xlu0 %2172
    %2174 = vrot.lane.b32.xlu0 %v13, 1
    %v2175 = vpop.permute.xlu0 %2174
    %2176 = vrot.lane.b32.xlu0 %v14, 1
    %v2177 = vpop.permute.xlu0 %2176
    %2178 = vrot.lane.b32.xlu0 %v15, 1
    %v2179 = vpop.permute.xlu0 %2178
    %2180 = vrot.lane.b32.xlu0 %v16, 1
    %v2181 = vpop.permute.xlu0 %2180
    %2182 = vrot.lane.b32.xlu0 %v17, 1
    %v2183 = vpop.permute.xlu0 %2182
    %2184 = vrot.lane.b32.xlu0 %v18, 1
    %v2185 = vpop.permute.xlu0 %2184
    %2186 = vrot.lane.b32.xlu0 %v19, 1
    %v2187 = vpop.permute.xlu0 %2186
    %2188 = vrot.lane.b32.xlu0 %v20, 1
    %v2189 = vpop.permute.xlu0 %2188
    %2190 = vrot.lane.b32.xlu0 %v21, 1
    %v2191 = vpop.permute.xlu0 %2190
    %2192 = vrot.lane.b32.xlu0 %v22, 1
    %v2193 = vpop.permute.xlu0 %2192
    %2194 = vrot.lane.b32.xlu0 %v23, 1
    %v2195 = vpop.permute.xlu0 %2194
    %2196 = vrot.lane.b32.xlu0 %v24, 1
    %v2197 = vpop.permute.xlu0 %2196
    %2198 = vrot.lane.b32.xlu0 %v25, 1
    %v2199 = vpop.permute.xlu0 %2198
    %2200 = vrot.lane.b32.xlu0 %v26, 1
    %v2201 = vpop.permute.xlu0 %2200
    %2202 = vrot.lane.b32.xlu0 %v27, 1
    %v2203 = vpop.permute.xlu0 %2202
    %v2220 = vmul.f32 %v1228, %v2173
    %v2221 = vmul.f32 %v1229, %v2175
    %v2222 = vmul.f32 %v1230, %v2177
    %v2223 = vmul.f32 %v1231, %v2179
    %v2224 = vmul.f32 %v1232, %v2181
    %v2225 = vmul.f32 %v1233, %v2183
    %v2226 = vmul.f32 %v1234, %v2185
    %v2227 = vmul.f32 %v1235, %v2187
    %v2228 = vmul.f32 %v1236, %v2189
    %v2229 = vmul.f32 %v1237, %v2191
    %v2230 = vmul.f32 %v1238, %v2193
    %v2231 = vmul.f32 %v1239, %v2195
    %v2232 = vmul.f32 %v1240, %v2197
    %v2233 = vmul.f32 %v1241, %v2199
    %v2234 = vmul.f32 %v1242, %v2201
    %v2235 = vmul.f32 %v1243, %v2203
    %2236 = vrot.lane.b32.xlu0 %v12, 6
    %v2237 = vpop.permute.xlu0 %2236
    %2238 = vrot.lane.b32.xlu0 %v13, 6
    %v2239 = vpop.permute.xlu0 %2238
    %2240 = vrot.lane.b32.xlu0 %v14, 6
    %v2241 = vpop.permute.xlu0 %2240
    %2242 = vrot.lane.b32.xlu0 %v15, 6
    %v2243 = vpop.permute.xlu0 %2242
    %2244 = vrot.lane.b32.xlu0 %v16, 6
    %v2245 = vpop.permute.xlu0 %2244
    %2246 = vrot.lane.b32.xlu0 %v17, 6
    %v2247 = vpop.permute.xlu0 %2246
    %2248 = vrot.lane.b32.xlu0 %v18, 6
    %v2249 = vpop.permute.xlu0 %2248
    %2250 = vrot.lane.b32.xlu0 %v19, 6
    %v2251 = vpop.permute.xlu0 %2250
    %2252 = vrot.lane.b32.xlu0 %v20, 6
    %v2253 = vpop.permute.xlu0 %2252
    %2254 = vrot.lane.b32.xlu0 %v21, 6
    %v2255 = vpop.permute.xlu0 %2254
    %2256 = vrot.lane.b32.xlu0 %v22, 6
    %v2257 = vpop.permute.xlu0 %2256
    %2258 = vrot.lane.b32.xlu0 %v23, 6
    %v2259 = vpop.permute.xlu0 %2258
    %2260 = vrot.lane.b32.xlu0 %v24, 6
    %v2261 = vpop.permute.xlu0 %2260
    %2262 = vrot.lane.b32.xlu0 %v25, 6
    %v2263 = vpop.permute.xlu0 %2262
    %2264 = vrot.lane.b32.xlu0 %v26, 6
    %v2265 = vpop.permute.xlu0 %2264
    %2266 = vrot.lane.b32.xlu0 %v27, 6
    %v2267 = vpop.permute.xlu0 %2266
    %v2284 = vmul.f32 %v1244, %v2237
    %v2285 = vmul.f32 %v1245, %v2239
    %v2286 = vmul.f32 %v1246, %v2241
    %v2287 = vmul.f32 %v1247, %v2243
    %v2288 = vmul.f32 %v1248, %v2245
    %v2289 = vmul.f32 %v1249, %v2247
    %v2290 = vmul.f32 %v1250, %v2249
    %v2291 = vmul.f32 %v1251, %v2251
    %v2292 = vmul.f32 %v1252, %v2253
    %v2293 = vmul.f32 %v1253, %v2255
    %v2294 = vmul.f32 %v1254, %v2257
    %v2295 = vmul.f32 %v1255, %v2259
    %v2296 = vmul.f32 %v1256, %v2261
    %v2297 = vmul.f32 %v1257, %v2263
    %v2298 = vmul.f32 %v1258, %v2265
    %v2299 = vmul.f32 %v1259, %v2267
    %v2300 = vadd.f32 %v2220, %v2284
    %v2301 = vadd.f32 %v2221, %v2285
    %v2302 = vadd.f32 %v2222, %v2286
    %v2303 = vadd.f32 %v2223, %v2287
    %v2304 = vadd.f32 %v2224, %v2288
    %v2305 = vadd.f32 %v2225, %v2289
    %v2306 = vadd.f32 %v2226, %v2290
    %v2307 = vadd.f32 %v2227, %v2291
    %v2308 = vadd.f32 %v2228, %v2292
    %v2309 = vadd.f32 %v2229, %v2293
    %v2310 = vadd.f32 %v2230, %v2294
    %v2311 = vadd.f32 %v2231, %v2295
    %v2312 = vadd.f32 %v2232, %v2296
    %v2313 = vadd.f32 %v2233, %v2297
    %v2314 = vadd.f32 %v2234, %v2298
    %v2315 = vadd.f32 %v2235, %v2299
    %2332 = vrot.lane.b32.xlu0 %v2300, 122
    %v2333 = vpop.permute.xlu0 %2332
    %2334 = vrot.lane.b32.xlu0 %v2301, 122
    %v2335 = vpop.permute.xlu0 %2334
    %2336 = vrot.lane.b32.xlu0 %v2302, 122
    %v2337 = vpop.permute.xlu0 %2336
    %2338 = vrot.lane.b32.xlu0 %v2303, 122
    %v2339 = vpop.permute.xlu0 %2338
    %2340 = vrot.lane.b32.xlu0 %v2304, 122
    %v2341 = vpop.permute.xlu0 %2340
    %2342 = vrot.lane.b32.xlu0 %v2305, 122
    %v2343 = vpop.permute.xlu0 %2342
    %2344 = vrot.lane.b32.xlu0 %v2306, 122
    %v2345 = vpop.permute.xlu0 %2344
    %2346 = vrot.lane.b32.xlu0 %v2307, 122
    %v2347 = vpop.permute.xlu0 %2346
    %2348 = vrot.lane.b32.xlu0 %v2308, 122
    %v2349 = vpop.permute.xlu0 %2348
    %2350 = vrot.lane.b32.xlu0 %v2309, 122
    %v2351 = vpop.permute.xlu0 %2350
    %2352 = vrot.lane.b32.xlu0 %v2310, 122
    %v2353 = vpop.permute.xlu0 %2352
    %2354 = vrot.lane.b32.xlu0 %v2311, 122
    %v2355 = vpop.permute.xlu0 %2354
    %2356 = vrot.lane.b32.xlu0 %v2312, 122
    %v2357 = vpop.permute.xlu0 %2356
    %2358 = vrot.lane.b32.xlu0 %v2313, 122
    %v2359 = vpop.permute.xlu0 %2358
    %2360 = vrot.lane.b32.xlu0 %v2314, 122
    %v2361 = vpop.permute.xlu0 %2360
    %2362 = vrot.lane.b32.xlu0 %v2315, 122
    %v2363 = vpop.permute.xlu0 %2362
    %v2380 = vmul.f32 %v28, %v2333
    %v2381 = vmul.f32 %v29, %v2335
    %v2382 = vmul.f32 %v30, %v2337
    %v2383 = vmul.f32 %v31, %v2339
    %v2384 = vmul.f32 %v32, %v2341
    %v2385 = vmul.f32 %v33, %v2343
    %v2386 = vmul.f32 %v34, %v2345
    %v2387 = vmul.f32 %v35, %v2347
    %v2388 = vmul.f32 %v36, %v2349
    %v2389 = vmul.f32 %v37, %v2351
    %v2390 = vmul.f32 %v38, %v2353
    %v2391 = vmul.f32 %v39, %v2355
    %v2392 = vmul.f32 %v40, %v2357
    %v2393 = vmul.f32 %v41, %v2359
    %v2394 = vmul.f32 %v42, %v2361
    %v2395 = vmul.f32 %v43, %v2363
    %v2396 = vmul.f32 %v28, %v28
    %v2397 = vmul.f32 %v29, %v29
    %v2398 = vmul.f32 %v30, %v30
    %v2399 = vmul.f32 %v31, %v31
    %v2400 = vmul.f32 %v32, %v32
    %v2401 = vmul.f32 %v33, %v33
    %v2402 = vmul.f32 %v34, %v34
    %v2403 = vmul.f32 %v35, %v35
    %v2404 = vmul.f32 %v36, %v36
    %v2405 = vmul.f32 %v37, %v37
    %v2406 = vmul.f32 %v38, %v38
    %v2407 = vmul.f32 %v39, %v39
    %v2408 = vmul.f32 %v40, %v40
    %v2409 = vmul.f32 %v41, %v41
    %v2410 = vmul.f32 %v42, %v42
    %v2411 = vmul.f32 %v43, %v43
    %v2412 = vsub.f32 %v2380, %v2396
    %v2413 = vsub.f32 %v2381, %v2397
    %v2414 = vsub.f32 %v2382, %v2398
    %v2415 = vsub.f32 %v2383, %v2399
    %v2416 = vsub.f32 %v2384, %v2400
    %v2417 = vsub.f32 %v2385, %v2401
    %v2418 = vsub.f32 %v2386, %v2402
    %v2419 = vsub.f32 %v2387, %v2403
    %v2420 = vsub.f32 %v2388, %v2404
    %v2421 = vsub.f32 %v2389, %v2405
    %v2422 = vsub.f32 %v2390, %v2406
    %v2423 = vsub.f32 %v2391, %v2407
    %v2424 = vsub.f32 %v2392, %v2408
    %v2425 = vsub.f32 %v2393, %v2409
    %v2426 = vsub.f32 %v2394, %v2410
    %v2427 = vsub.f32 %v2395, %v2411
    %v2428 = vsub.f32 %v12, %v28
    %v2429 = vsub.f32 %v13, %v29
    %v2430 = vsub.f32 %v14, %v30
    %v2431 = vsub.f32 %v15, %v31
    %v2432 = vsub.f32 %v16, %v32
    %v2433 = vsub.f32 %v17, %v33
    %v2434 = vsub.f32 %v18, %v34
    %v2435 = vsub.f32 %v19, %v35
    %v2436 = vsub.f32 %v20, %v36
    %v2437 = vsub.f32 %v21, %v37
    %v2438 = vsub.f32 %v22, %v38
    %v2439 = vsub.f32 %v23, %v39
    %v2440 = vsub.f32 %v24, %v40
    %v2441 = vsub.f32 %v25, %v41
    %v2442 = vsub.f32 %v26, %v42
    %v2443 = vsub.f32 %v27, %v43
    %v2444 = vmul.f32 %v1260, %v2428
    %v2445 = vmul.f32 %v1261, %v2429
    %v2446 = vmul.f32 %v1262, %v2430
    %v2447 = vmul.f32 %v1263, %v2431
    %v2448 = vmul.f32 %v1264, %v2432
    %v2449 = vmul.f32 %v1265, %v2433
    %v2450 = vmul.f32 %v1266, %v2434
    %v2451 = vmul.f32 %v1267, %v2435
    %v2452 = vmul.f32 %v1268, %v2436
    %v2453 = vmul.f32 %v1269, %v2437
    %v2454 = vmul.f32 %v1270, %v2438
    %v2455 = vmul.f32 %v1271, %v2439
    %v2456 = vmul.f32 %v1272, %v2440
    %v2457 = vmul.f32 %v1273, %v2441
    %v2458 = vmul.f32 %v1274, %v2442
    %v2459 = vmul.f32 %v1275, %v2443
    %2460 = vrot.lane.b32.xlu0 %v28, 5
    %v2461 = vpop.permute.xlu0 %2460
    %2462 = vrot.lane.b32.xlu0 %v29, 5
    %v2463 = vpop.permute.xlu0 %2462
    %2464 = vrot.lane.b32.xlu0 %v30, 5
    %v2465 = vpop.permute.xlu0 %2464
    %2466 = vrot.lane.b32.xlu0 %v31, 5
    %v2467 = vpop.permute.xlu0 %2466
    %2468 = vrot.lane.b32.xlu0 %v32, 5
    %v2469 = vpop.permute.xlu0 %2468
    %2470 = vrot.lane.b32.xlu0 %v33, 5
    %v2471 = vpop.permute.xlu0 %2470
    %2472 = vrot.lane.b32.xlu0 %v34, 5
    %v2473 = vpop.permute.xlu0 %2472
    %2474 = vrot.lane.b32.xlu0 %v35, 5
    %v2475 = vpop.permute.xlu0 %2474
    %2476 = vrot.lane.b32.xlu0 %v36, 5
    %v2477 = vpop.permute.xlu0 %2476
    %2478 = vrot.lane.b32.xlu0 %v37, 5
    %v2479 = vpop.permute.xlu0 %2478
    %2480 = vrot.lane.b32.xlu0 %v38, 5
    %v2481 = vpop.permute.xlu0 %2480
    %2482 = vrot.lane.b32.xlu0 %v39, 5
    %v2483 = vpop.permute.xlu0 %2482
    %2484 = vrot.lane.b32.xlu0 %v40, 5
    %v2485 = vpop.permute.xlu0 %2484
    %2486 = vrot.lane.b32.xlu0 %v41, 5
    %v2487 = vpop.permute.xlu0 %2486
    %2488 = vrot.lane.b32.xlu0 %v42, 5
    %v2489 = vpop.permute.xlu0 %2488
    %2490 = vrot.lane.b32.xlu0 %v43, 5
    %v2491 = vpop.permute.xlu0 %2490
    %v2508 = vsub.f32 %v12, %v2461
    %v2509 = vsub.f32 %v13, %v2463
    %v2510 = vsub.f32 %v14, %v2465
    %v2511 = vsub.f32 %v15, %v2467
    %v2512 = vsub.f32 %v16, %v2469
    %v2513 = vsub.f32 %v17, %v2471
    %v2514 = vsub.f32 %v18, %v2473
    %v2515 = vsub.f32 %v19, %v2475
    %v2516 = vsub.f32 %v20, %v2477
    %v2517 = vsub.f32 %v21, %v2479
    %v2518 = vsub.f32 %v22, %v2481
    %v2519 = vsub.f32 %v23, %v2483
    %v2520 = vsub.f32 %v24, %v2485
    %v2521 = vsub.f32 %v25, %v2487
    %v2522 = vsub.f32 %v26, %v2489
    %v2523 = vsub.f32 %v27, %v2491
    %2540 = vrot.lane.b32.xlu0 %v2508, 123
    %v2541 = vpop.permute.xlu0 %2540
    %2542 = vrot.lane.b32.xlu0 %v2509, 123
    %v2543 = vpop.permute.xlu0 %2542
    %2544 = vrot.lane.b32.xlu0 %v2510, 123
    %v2545 = vpop.permute.xlu0 %2544
    %2546 = vrot.lane.b32.xlu0 %v2511, 123
    %v2547 = vpop.permute.xlu0 %2546
    %2548 = vrot.lane.b32.xlu0 %v2512, 123
    %v2549 = vpop.permute.xlu0 %2548
    %2550 = vrot.lane.b32.xlu0 %v2513, 123
    %v2551 = vpop.permute.xlu0 %2550
    %2552 = vrot.lane.b32.xlu0 %v2514, 123
    %v2553 = vpop.permute.xlu0 %2552
    %2554 = vrot.lane.b32.xlu0 %v2515, 123
    %v2555 = vpop.permute.xlu0 %2554
    %2556 = vrot.lane.b32.xlu0 %v2516, 123
    %v2557 = vpop.permute.xlu0 %2556
    %2558 = vrot.lane.b32.xlu0 %v2517, 123
    %v2559 = vpop.permute.xlu0 %2558
    %2560 = vrot.lane.b32.xlu0 %v2518, 123
    %v2561 = vpop.permute.xlu0 %2560
    %2562 = vrot.lane.b32.xlu0 %v2519, 123
    %v2563 = vpop.permute.xlu0 %2562
    %2564 = vrot.lane.b32.xlu0 %v2520, 123
    %v2565 = vpop.permute.xlu0 %2564
    %2566 = vrot.lane.b32.xlu0 %v2521, 123
    %v2567 = vpop.permute.xlu0 %2566
    %2568 = vrot.lane.b32.xlu0 %v2522, 123
    %v2569 = vpop.permute.xlu0 %2568
    %2570 = vrot.lane.b32.xlu0 %v2523, 123
    %v2571 = vpop.permute.xlu0 %2570
    %v2588 = vmul.f32 %v1260, %v2541
    %v2589 = vmul.f32 %v1261, %v2543
    %v2590 = vmul.f32 %v1262, %v2545
    %v2591 = vmul.f32 %v1263, %v2547
    %v2592 = vmul.f32 %v1264, %v2549
    %v2593 = vmul.f32 %v1265, %v2551
    %v2594 = vmul.f32 %v1266, %v2553
    %v2595 = vmul.f32 %v1267, %v2555
    %v2596 = vmul.f32 %v1268, %v2557
    %v2597 = vmul.f32 %v1269, %v2559
    %v2598 = vmul.f32 %v1270, %v2561
    %v2599 = vmul.f32 %v1271, %v2563
    %v2600 = vmul.f32 %v1272, %v2565
    %v2601 = vmul.f32 %v1273, %v2567
    %v2602 = vmul.f32 %v1274, %v2569
    %v2603 = vmul.f32 %v1275, %v2571
    %v2604 = vmul.f32 %v1551, %v2428
    %v2605 = vmul.f32 %v1556, %v2429
    %v2606 = vmul.f32 %v1561, %v2430
    %v2607 = vmul.f32 %v1566, %v2431
    %v2608 = vmul.f32 %v1571, %v2432
    %v2609 = vmul.f32 %v1576, %v2433
    %v2610 = vmul.f32 %v1581, %v2434
    %v2611 = vmul.f32 %v1586, %v2435
    %v2612 = vmul.f32 %v1591, %v2436
    %v2613 = vmul.f32 %v1596, %v2437
    %v2614 = vmul.f32 %v1601, %v2438
    %v2615 = vmul.f32 %v1606, %v2439
    %v2616 = vmul.f32 %v1611, %v2440
    %v2617 = vmul.f32 %v1616, %v2441
    %v2618 = vmul.f32 %v1621, %v2442
    %v2619 = vmul.f32 %v1626, %v2443
    %2636 = vrot.lane.b32.xlu0 %v2140, 127
    %v2637 = vpop.permute.xlu0 %2636
    %2638 = vrot.lane.b32.xlu0 %v2141, 127
    %v2639 = vpop.permute.xlu0 %2638
    %2640 = vrot.lane.b32.xlu0 %v2142, 127
    %v2641 = vpop.permute.xlu0 %2640
    %2642 = vrot.lane.b32.xlu0 %v2143, 127
    %v2643 = vpop.permute.xlu0 %2642
    %2644 = vrot.lane.b32.xlu0 %v2144, 127
    %v2645 = vpop.permute.xlu0 %2644
    %2646 = vrot.lane.b32.xlu0 %v2145, 127
    %v2647 = vpop.permute.xlu0 %2646
    %2648 = vrot.lane.b32.xlu0 %v2146, 127
    %v2649 = vpop.permute.xlu0 %2648
    %2650 = vrot.lane.b32.xlu0 %v2147, 127
    %v2651 = vpop.permute.xlu0 %2650
    %2652 = vrot.lane.b32.xlu0 %v2148, 127
    %v2653 = vpop.permute.xlu0 %2652
    %2654 = vrot.lane.b32.xlu0 %v2149, 127
    %v2655 = vpop.permute.xlu0 %2654
    %2656 = vrot.lane.b32.xlu0 %v2150, 127
    %v2657 = vpop.permute.xlu0 %2656
    %2658 = vrot.lane.b32.xlu0 %v2151, 127
    %v2659 = vpop.permute.xlu0 %2658
    %2660 = vrot.lane.b32.xlu0 %v2152, 127
    %v2661 = vpop.permute.xlu0 %2660
    %2662 = vrot.lane.b32.xlu0 %v2153, 127
    %v2663 = vpop.permute.xlu0 %2662
    %2664 = vrot.lane.b32.xlu0 %v2154, 127
    %v2665 = vpop.permute.xlu0 %2664
    %2666 = vrot.lane.b32.xlu0 %v2155, 127
    %v2667 = vpop.permute.xlu0 %2666
    %v2684 = vadd.f32 %v2140, %v2637
    %v2685 = vadd.f32 %v2141, %v2639
    %v2686 = vadd.f32 %v2142, %v2641
    %v2687 = vadd.f32 %v2143, %v2643
    %v2688 = vadd.f32 %v2144, %v2645
    %v2689 = vadd.f32 %v2145, %v2647
    %v2690 = vadd.f32 %v2146, %v2649
    %v2691 = vadd.f32 %v2147, %v2651
    %v2692 = vadd.f32 %v2148, %v2653
    %v2693 = vadd.f32 %v2149, %v2655
    %v2694 = vadd.f32 %v2150, %v2657
    %v2695 = vadd.f32 %v2151, %v2659
    %v2696 = vadd.f32 %v2152, %v2661
    %v2697 = vadd.f32 %v2153, %v2663
    %v2698 = vadd.f32 %v2154, %v2665
    %v2699 = vadd.f32 %v2155, %v2667
    %v2700 = vmul.f32 %v2684, 5.0
    %v2701 = vmul.f32 %v2685, 5.0
    %v2702 = vmul.f32 %v2686, 5.0
    %v2703 = vmul.f32 %v2687, 5.0
    %v2704 = vmul.f32 %v2688, 5.0
    %v2705 = vmul.f32 %v2689, 5.0
    %v2706 = vmul.f32 %v2690, 5.0
    %v2707 = vmul.f32 %v2691, 5.0
    %v2708 = vmul.f32 %v2692, 5.0
    %v2709 = vmul.f32 %v2693, 5.0
    %v2710 = vmul.f32 %v2694, 5.0
    %v2711 = vmul.f32 %v2695, 5.0
    %v2712 = vmul.f32 %v2696, 5.0
    %v2713 = vmul.f32 %v2697, 5.0
    %v2714 = vmul.f32 %v2698, 5.0
    %v2715 = vmul.f32 %v2699, 5.0
    %v2716 = vmul.f32 %v2412, %v2412
    %v2717 = vmul.f32 %v2413, %v2413
    %v2718 = vmul.f32 %v2414, %v2414
    %v2719 = vmul.f32 %v2415, %v2415
    %v2720 = vmul.f32 %v2416, %v2416
    %v2721 = vmul.f32 %v2417, %v2417
    %v2722 = vmul.f32 %v2418, %v2418
    %v2723 = vmul.f32 %v2419, %v2419
    %v2724 = vmul.f32 %v2420, %v2420
    %v2725 = vmul.f32 %v2421, %v2421
    %v2726 = vmul.f32 %v2422, %v2422
    %v2727 = vmul.f32 %v2423, %v2423
    %v2728 = vmul.f32 %v2424, %v2424
    %v2729 = vmul.f32 %v2425, %v2425
    %v2730 = vmul.f32 %v2426, %v2426
    %v2731 = vmul.f32 %v2427, %v2427
    %2748 = vrot.lane.b32.xlu0 %v2716, 6
    %v2749 = vpop.permute.xlu0 %2748
    %2750 = vrot.lane.b32.xlu0 %v2717, 6
    %v2751 = vpop.permute.xlu0 %2750
    %2752 = vrot.lane.b32.xlu0 %v2718, 6
    %v2753 = vpop.permute.xlu0 %2752
    %2754 = vrot.lane.b32.xlu0 %v2719, 6
    %v2755 = vpop.permute.xlu0 %2754
    %2756 = vrot.lane.b32.xlu0 %v2720, 6
    %v2757 = vpop.permute.xlu0 %2756
    %2758 = vrot.lane.b32.xlu0 %v2721, 6
    %v2759 = vpop.permute.xlu0 %2758
    %2760 = vrot.lane.b32.xlu0 %v2722, 6
    %v2761 = vpop.permute.xlu0 %2760
    %2762 = vrot.lane.b32.xlu0 %v2723, 6
    %v2763 = vpop.permute.xlu0 %2762
    %2764 = vrot.lane.b32.xlu0 %v2724, 6
    %v2765 = vpop.permute.xlu0 %2764
    %2766 = vrot.lane.b32.xlu0 %v2725, 6
    %v2767 = vpop.permute.xlu0 %2766
    %2768 = vrot.lane.b32.xlu0 %v2726, 6
    %v2769 = vpop.permute.xlu0 %2768
    %2770 = vrot.lane.b32.xlu0 %v2727, 6
    %v2771 = vpop.permute.xlu0 %2770
    %2772 = vrot.lane.b32.xlu0 %v2728, 6
    %v2773 = vpop.permute.xlu0 %2772
    %2774 = vrot.lane.b32.xlu0 %v2729, 6
    %v2775 = vpop.permute.xlu0 %2774
    %2776 = vrot.lane.b32.xlu0 %v2730, 6
    %v2777 = vpop.permute.xlu0 %2776
    %2778 = vrot.lane.b32.xlu0 %v2731, 6
    %v2779 = vpop.permute.xlu0 %2778
    %v2796 = vadd.f32 %v2700, %v2749
    %v2797 = vadd.f32 %v2701, %v2751
    %v2798 = vadd.f32 %v2702, %v2753
    %v2799 = vadd.f32 %v2703, %v2755
    %v2800 = vadd.f32 %v2704, %v2757
    %v2801 = vadd.f32 %v2705, %v2759
    %v2802 = vadd.f32 %v2706, %v2761
    %v2803 = vadd.f32 %v2707, %v2763
    %v2804 = vadd.f32 %v2708, %v2765
    %v2805 = vadd.f32 %v2709, %v2767
    %v2806 = vadd.f32 %v2710, %v2769
    %v2807 = vadd.f32 %v2711, %v2771
    %v2808 = vadd.f32 %v2712, %v2773
    %v2809 = vadd.f32 %v2713, %v2775
    %v2810 = vadd.f32 %v2714, %v2777
    %v2811 = vadd.f32 %v2715, %v2779
    %v2812 = vmul.f32 %v2444, %v2444
    %v2813 = vmul.f32 %v2445, %v2445
    %v2814 = vmul.f32 %v2446, %v2446
    %v2815 = vmul.f32 %v2447, %v2447
    %v2816 = vmul.f32 %v2448, %v2448
    %v2817 = vmul.f32 %v2449, %v2449
    %v2818 = vmul.f32 %v2450, %v2450
    %v2819 = vmul.f32 %v2451, %v2451
    %v2820 = vmul.f32 %v2452, %v2452
    %v2821 = vmul.f32 %v2453, %v2453
    %v2822 = vmul.f32 %v2454, %v2454
    %v2823 = vmul.f32 %v2455, %v2455
    %v2824 = vmul.f32 %v2456, %v2456
    %v2825 = vmul.f32 %v2457, %v2457
    %v2826 = vmul.f32 %v2458, %v2458
    %v2827 = vmul.f32 %v2459, %v2459
    %v2828 = vmul.f32 %v2588, %v2588
    %v2829 = vmul.f32 %v2589, %v2589
    %v2830 = vmul.f32 %v2590, %v2590
    %v2831 = vmul.f32 %v2591, %v2591
    %v2832 = vmul.f32 %v2592, %v2592
    %v2833 = vmul.f32 %v2593, %v2593
    %v2834 = vmul.f32 %v2594, %v2594
    %v2835 = vmul.f32 %v2595, %v2595
    %v2836 = vmul.f32 %v2596, %v2596
    %v2837 = vmul.f32 %v2597, %v2597
    %v2838 = vmul.f32 %v2598, %v2598
    %v2839 = vmul.f32 %v2599, %v2599
    %v2840 = vmul.f32 %v2600, %v2600
    %v2841 = vmul.f32 %v2601, %v2601
    %v2842 = vmul.f32 %v2602, %v2602
    %v2843 = vmul.f32 %v2603, %v2603
    %v2844 = vadd.f32 %v2812, %v2828
    %v2845 = vadd.f32 %v2813, %v2829
    %v2846 = vadd.f32 %v2814, %v2830
    %v2847 = vadd.f32 %v2815, %v2831
    %v2848 = vadd.f32 %v2816, %v2832
    %v2849 = vadd.f32 %v2817, %v2833
    %v2850 = vadd.f32 %v2818, %v2834
    %v2851 = vadd.f32 %v2819, %v2835
    %v2852 = vadd.f32 %v2820, %v2836
    %v2853 = vadd.f32 %v2821, %v2837
    %v2854 = vadd.f32 %v2822, %v2838
    %v2855 = vadd.f32 %v2823, %v2839
    %v2856 = vadd.f32 %v2824, %v2840
    %v2857 = vadd.f32 %v2825, %v2841
    %v2858 = vadd.f32 %v2826, %v2842
    %v2859 = vadd.f32 %v2827, %v2843
    %v2860 = vmul.f32 %v2844, 0.5
    %v2861 = vmul.f32 %v2845, 0.5
    %v2862 = vmul.f32 %v2846, 0.5
    %v2863 = vmul.f32 %v2847, 0.5
    %v2864 = vmul.f32 %v2848, 0.5
    %v2865 = vmul.f32 %v2849, 0.5
    %v2866 = vmul.f32 %v2850, 0.5
    %v2867 = vmul.f32 %v2851, 0.5
    %v2868 = vmul.f32 %v2852, 0.5
    %v2869 = vmul.f32 %v2853, 0.5
    %v2870 = vmul.f32 %v2854, 0.5
    %v2871 = vmul.f32 %v2855, 0.5
    %v2872 = vmul.f32 %v2856, 0.5
    %v2873 = vmul.f32 %v2857, 0.5
    %v2874 = vmul.f32 %v2858, 0.5
    %v2875 = vmul.f32 %v2859, 0.5
    %2892 = vrot.lane.b32.xlu0 %v2860, 6
    %v2893 = vpop.permute.xlu0 %2892
    %2894 = vrot.lane.b32.xlu0 %v2861, 6
    %v2895 = vpop.permute.xlu0 %2894
    %2896 = vrot.lane.b32.xlu0 %v2862, 6
    %v2897 = vpop.permute.xlu0 %2896
    %2898 = vrot.lane.b32.xlu0 %v2863, 6
    %v2899 = vpop.permute.xlu0 %2898
    %2900 = vrot.lane.b32.xlu0 %v2864, 6
    %v2901 = vpop.permute.xlu0 %2900
    %2902 = vrot.lane.b32.xlu0 %v2865, 6
    %v2903 = vpop.permute.xlu0 %2902
    %2904 = vrot.lane.b32.xlu0 %v2866, 6
    %v2905 = vpop.permute.xlu0 %2904
    %2906 = vrot.lane.b32.xlu0 %v2867, 6
    %v2907 = vpop.permute.xlu0 %2906
    %2908 = vrot.lane.b32.xlu0 %v2868, 6
    %v2909 = vpop.permute.xlu0 %2908
    %2910 = vrot.lane.b32.xlu0 %v2869, 6
    %v2911 = vpop.permute.xlu0 %2910
    %2912 = vrot.lane.b32.xlu0 %v2870, 6
    %v2913 = vpop.permute.xlu0 %2912
    %2914 = vrot.lane.b32.xlu0 %v2871, 6
    %v2915 = vpop.permute.xlu0 %2914
    %2916 = vrot.lane.b32.xlu0 %v2872, 6
    %v2917 = vpop.permute.xlu0 %2916
    %2918 = vrot.lane.b32.xlu0 %v2873, 6
    %v2919 = vpop.permute.xlu0 %2918
    %2920 = vrot.lane.b32.xlu0 %v2874, 6
    %v2921 = vpop.permute.xlu0 %2920
    %2922 = vrot.lane.b32.xlu0 %v2875, 6
    %v2923 = vpop.permute.xlu0 %2922
    %v2940 = vadd.f32 %v2796, %v2893
    %v2941 = vadd.f32 %v2797, %v2895
    %v2942 = vadd.f32 %v2798, %v2897
    %v2943 = vadd.f32 %v2799, %v2899
    %v2944 = vadd.f32 %v2800, %v2901
    %v2945 = vadd.f32 %v2801, %v2903
    %v2946 = vadd.f32 %v2802, %v2905
    %v2947 = vadd.f32 %v2803, %v2907
    %v2948 = vadd.f32 %v2804, %v2909
    %v2949 = vadd.f32 %v2805, %v2911
    %v2950 = vadd.f32 %v2806, %v2913
    %v2951 = vadd.f32 %v2807, %v2915
    %v2952 = vadd.f32 %v2808, %v2917
    %v2953 = vadd.f32 %v2809, %v2919
    %v2954 = vadd.f32 %v2810, %v2921
    %v2955 = vadd.f32 %v2811, %v2923
    %v2956 = vmul.f32 %v2604, %v2604
    %v2957 = vmul.f32 %v2605, %v2605
    %v2958 = vmul.f32 %v2606, %v2606
    %v2959 = vmul.f32 %v2607, %v2607
    %v2960 = vmul.f32 %v2608, %v2608
    %v2961 = vmul.f32 %v2609, %v2609
    %v2962 = vmul.f32 %v2610, %v2610
    %v2963 = vmul.f32 %v2611, %v2611
    %v2964 = vmul.f32 %v2612, %v2612
    %v2965 = vmul.f32 %v2613, %v2613
    %v2966 = vmul.f32 %v2614, %v2614
    %v2967 = vmul.f32 %v2615, %v2615
    %v2968 = vmul.f32 %v2616, %v2616
    %v2969 = vmul.f32 %v2617, %v2617
    %v2970 = vmul.f32 %v2618, %v2618
    %v2971 = vmul.f32 %v2619, %v2619
    %vm2972 = vcmask 162816
    %v2973 = vsel %vm2972, %v2956, 0.0
    %2974 = vadd.xlane.f32.xlu0 %v2973
    %v2975 = vpop.xlane.xlu0 %2974
    %v2976 = vsel %vm2972, %v2957, 0.0
    %2977 = vadd.xlane.f32.xlu0 %v2976
    %v2978 = vpop.xlane.xlu0 %2977
    %v2979 = vsel %vm2972, %v2958, 0.0
    %2980 = vadd.xlane.f32.xlu0 %v2979
    %v2981 = vpop.xlane.xlu0 %2980
    %v2982 = vsel %vm2972, %v2959, 0.0
    %2983 = vadd.xlane.f32.xlu0 %v2982
    %v2984 = vpop.xlane.xlu0 %2983
    %v2985 = vsel %vm2972, %v2960, 0.0
    %2986 = vadd.xlane.f32.xlu0 %v2985
    %v2987 = vpop.xlane.xlu0 %2986
    %v2988 = vsel %vm2972, %v2961, 0.0
    %2989 = vadd.xlane.f32.xlu0 %v2988
    %v2990 = vpop.xlane.xlu0 %2989
    %v2991 = vsel %vm2972, %v2962, 0.0
    %2992 = vadd.xlane.f32.xlu0 %v2991
    %v2993 = vpop.xlane.xlu0 %2992
    %v2994 = vsel %vm2972, %v2963, 0.0
    %2995 = vadd.xlane.f32.xlu0 %v2994
    %v2996 = vpop.xlane.xlu0 %2995
    %v2997 = vsel %vm2972, %v2964, 0.0
    %2998 = vadd.xlane.f32.xlu0 %v2997
    %v2999 = vpop.xlane.xlu0 %2998
    %v3000 = vsel %vm2972, %v2965, 0.0
    %3001 = vadd.xlane.f32.xlu0 %v3000
    %v3002 = vpop.xlane.xlu0 %3001
    %v3003 = vsel %vm2972, %v2966, 0.0
    %3004 = vadd.xlane.f32.xlu0 %v3003
    %v3005 = vpop.xlane.xlu0 %3004
    %v3006 = vsel %vm2972, %v2967, 0.0
    %3007 = vadd.xlane.f32.xlu0 %v3006
    %v3008 = vpop.xlane.xlu0 %3007
    %v3009 = vsel %vm2972, %v2968, 0.0
    %3010 = vadd.xlane.f32.xlu0 %v3009
    %v3011 = vpop.xlane.xlu0 %3010
    %v3012 = vsel %vm2972, %v2969, 0.0
    %3013 = vadd.xlane.f32.xlu0 %v3012
    %v3014 = vpop.xlane.xlu0 %3013
    %v3015 = vsel %vm2972, %v2970, 0.0
    %3016 = vadd.xlane.f32.xlu0 %v3015
    %v3017 = vpop.xlane.xlu0 %3016
    %v3018 = vsel %vm2972, %v2971, 0.0
    %3019 = vadd.xlane.f32.xlu0 %v3018
    %v3020 = vpop.xlane.xlu0 %3019
    %v3021 = vadd.f32 %v2940, %v2975
    %v3022 = vadd.f32 %v2941, %v2978
    %v3023 = vadd.f32 %v2942, %v2981
    %v3024 = vadd.f32 %v2943, %v2984
    %v3025 = vadd.f32 %v2944, %v2987
    %v3026 = vadd.f32 %v2945, %v2990
    %v3027 = vadd.f32 %v2946, %v2993
    %v3028 = vadd.f32 %v2947, %v2996
    %v3029 = vadd.f32 %v2948, %v2999
    %v3030 = vadd.f32 %v2949, %v3002
    %v3031 = vadd.f32 %v2950, %v3005
    %v3032 = vadd.f32 %v2951, %v3008
    %v3033 = vadd.f32 %v2952, %v3011
    %v3034 = vadd.f32 %v2953, %v3014
    %v3035 = vadd.f32 %v2954, %v3017
    %v3036 = vadd.f32 %v2955, %v3020
    %3053 = vrot.lane.b32.xlu0 %v3021, 102
    %v3054 = vpop.permute.xlu0 %3053
    %3055 = vrot.lane.b32.xlu0 %v3022, 102
    %v3056 = vpop.permute.xlu0 %3055
    %3057 = vrot.lane.b32.xlu0 %v3023, 102
    %v3058 = vpop.permute.xlu0 %3057
    %3059 = vrot.lane.b32.xlu0 %v3024, 102
    %v3060 = vpop.permute.xlu0 %3059
    %3061 = vrot.lane.b32.xlu0 %v3025, 102
    %v3062 = vpop.permute.xlu0 %3061
    %3063 = vrot.lane.b32.xlu0 %v3026, 102
    %v3064 = vpop.permute.xlu0 %3063
    %3065 = vrot.lane.b32.xlu0 %v3027, 102
    %v3066 = vpop.permute.xlu0 %3065
    %3067 = vrot.lane.b32.xlu0 %v3028, 102
    %v3068 = vpop.permute.xlu0 %3067
    %3069 = vrot.lane.b32.xlu0 %v3029, 102
    %v3070 = vpop.permute.xlu0 %3069
    %3071 = vrot.lane.b32.xlu0 %v3030, 102
    %v3072 = vpop.permute.xlu0 %3071
    %3073 = vrot.lane.b32.xlu0 %v3031, 102
    %v3074 = vpop.permute.xlu0 %3073
    %3075 = vrot.lane.b32.xlu0 %v3032, 102
    %v3076 = vpop.permute.xlu0 %3075
    %3077 = vrot.lane.b32.xlu0 %v3033, 102
    %v3078 = vpop.permute.xlu0 %3077
    %3079 = vrot.lane.b32.xlu0 %v3034, 102
    %v3080 = vpop.permute.xlu0 %3079
    %3081 = vrot.lane.b32.xlu0 %v3035, 102
    %v3082 = vpop.permute.xlu0 %3081
    %3083 = vrot.lane.b32.xlu0 %v3036, 102
    %v3084 = vpop.permute.xlu0 %3083
    %vm3101 = vcmask 7168
    %v3102 = vsel %vm3101, %v3054, 0.0
    %v3103 = vsel %vm3101, %v3056, 0.0
    %v3104 = vadd.f32 %v3102, %v3103
    %v3105 = vsel %vm3101, %v3058, 0.0
    %v3106 = vadd.f32 %v3104, %v3105
    %v3107 = vsel %vm3101, %v3060, 0.0
    %v3108 = vadd.f32 %v3106, %v3107
    %v3109 = vsel %vm3101, %v3062, 0.0
    %v3110 = vadd.f32 %v3108, %v3109
    %v3111 = vsel %vm3101, %v3064, 0.0
    %v3112 = vadd.f32 %v3110, %v3111
    %v3113 = vsel %vm3101, %v3066, 0.0
    %v3114 = vadd.f32 %v3112, %v3113
    %v3115 = vsel %vm3101, %v3068, 0.0
    %v3116 = vadd.f32 %v3114, %v3115
    %v3117 = vsel %vm3101, %v3070, 0.0
    %v3118 = vadd.f32 %v3116, %v3117
    %v3119 = vsel %vm3101, %v3072, 0.0
    %v3120 = vadd.f32 %v3118, %v3119
    %v3121 = vsel %vm3101, %v3074, 0.0
    %v3122 = vadd.f32 %v3120, %v3121
    %v3123 = vsel %vm3101, %v3076, 0.0
    %v3124 = vadd.f32 %v3122, %v3123
    %v3125 = vsel %vm3101, %v3078, 0.0
    %v3126 = vadd.f32 %v3124, %v3125
    %v3127 = vsel %vm3101, %v3080, 0.0
    %v3128 = vadd.f32 %v3126, %v3127
    %v3129 = vsel %vm3101, %v3082, 0.0
    %v3130 = vadd.f32 %v3128, %v3129
    %v3131 = vsel %vm3101, %v3084, 0.0
    %v3132 = vadd.f32 %v3130, %v3131
    %3133 = vadd.xlane.f32.xlu0 %v3132
    %v3134 = vpop.xlane.xlu0 %3133
    %v3135 = vrot.slane %v3134, 4
    %v3136 = vadd.f32 %v3134, %v3135
    %v3137 = vrot.slane %v3136, 2
    %v3138 = vadd.f32 %v3136, %v3137
    %v3139 = vrot.slane %v3138, 1
    %v3140 = vadd.f32 %v3138, %v3139
    %s3141 = vtos %v3140
    %p3142 = scmp.eq.s32.totalorder 0, 0
    // Predicated region
    $region10: #{tpu_custom_call.1} parent=1 // pred_check
      %p3143 = pneg %p3142
    $region11: #{tpu_custom_call.1} parent=1 // pred_check_branch
      %3145 = sbr.rel (%p3143) target = $region13
    $region12: #{tpu_custom_call.1} parent=1 // pred_region
      %s3146 = scalar_lea.smem [#allocation2], 0
      %3147 = sst [smem:[%s3146]] 0.0
    $region13: #{tpu_custom_call.1} parent=1 // pred_fallthru
      _
    %s3148 = sld [smem:[#allocation2]]
    %s3149 = sadd.f32 %s3148, %s3141
    %s3150 = scalar_lea.smem [#allocation2], 0
    %3151 = sst [smem:[%s3150]] %s3149
    // Predicated region
    $region14: #{tpu_custom_call.1} parent=1 // pred_check
      _
    $region15: #{tpu_custom_call.1} parent=1 // pred_check_branch
      %3153 = sbr.rel (0) target = $region17
    $region16: #{tpu_custom_call.1} parent=1 // pred_region
      %s3155 = ssub.s32 16, 16
      %3156 = vsyncadd [#allocation3], %s3155
      %3159 = dma.smem_to_hbm [#allocation2], 16, %s2, [#allocation3]
    $region17: #{tpu_custom_call.1} parent=1 // pred_fallthru
      _
    // Predicated region
    $region18: #{tpu_custom_call.1} parent=1 // pred_check
      _
    $region19: #{tpu_custom_call.1} parent=1 // pred_check_branch
      %3161 = sbr.rel (0) target = $region21
    $region20: #{tpu_custom_call.1} parent=1 // pred_region
      %3162 = dma.done [#allocation3], 16
    $region21: #{tpu_custom_call.1} parent=1 // pred_fallthru
      _
    %3163 = sfence
    %3164 = vsyncpa [#allocation3], 1

</llo_original>
